<compile_context>
chip_gen: v7x
topology: tpu7x:2x2x1
jax: 0.10.0
libtpu: 0.0.40
codegen_flags: <defaults>
</compile_context>

<pallas_src>
import jax
import jax.numpy as jnp
from jax.experimental import pallas as pl
from jax.experimental.pallas import tpu as pltpu


# --------------------------------------------------------------------------
# Pallas kernel: fused SA_Layer forward for one batch element
# --------------------------------------------------------------------------

def _sa_kernel(x_ref, wqk_ref, wv_ref, bv_ref, wt_ref, bt_ref, out_ref):
    x = x_ref[0]                                  # (N, C) float32, channels-last
    xb = x.astype(jnp.bfloat16)

    # Shared q/k projection (q_conv.weight is tied to k_conv.weight, bias=False).
    qk = jnp.dot(xb, wqk_ref[...], preferred_element_type=jnp.float32)     # (N, C//4)
    # Value projection (+ bias).
    v = jnp.dot(xb, wv_ref[...], preferred_element_type=jnp.float32) + bv_ref[...]  # (N, C)

    # energy = x_q @ x_k == (xW)(xW)^T  (symmetric because the weights are tied).
    qkb = qk.astype(jnp.bfloat16)
    energy = jax.lax.dot_general(
        qkb, qkb, (((1,), (1,)), ((), ())),
        preferred_element_type=jnp.float32)                                 # (Nq, Nk)

    # Row softmax over keys (f32, stable).
    m = jnp.max(energy, axis=-1, keepdims=True)
    e = jnp.exp(energy - m)
    attn = e * pl.reciprocal(jnp.sum(e, axis=-1, keepdims=True), approx=True)
    # Extra normalization over the *query* axis (torch: attention.sum(dim=1, keepdims=True)).
    col = jnp.sum(attn, axis=0, keepdims=True)                              # (1, Nk)
    attn = attn * pl.reciprocal(1e-9 + col, approx=True)

    # x_r (channels-last) = attn^T @ v : contract the query axis.
    x_r = jax.lax.dot_general(
        attn.astype(jnp.bfloat16), v.astype(jnp.bfloat16),
        (((0,), (0,)), ((), ())),
        preferred_element_type=jnp.float32)                                 # (Nk, C)

    # trans_conv with BN(eval) folded into the weight/bias, then ReLU + residual.
    d = (x - x_r).astype(jnp.bfloat16)
    t = jnp.dot(d, wt_ref[...], preferred_element_type=jnp.float32) + bt_ref[...]
    out_ref[0] = x + jnp.maximum(t, 0.0)


def sa_layer_pallas(x_cl, w_qk, w_v, b_v, w_t_folded, b_t_folded):
    """x_cl: [B, N, C] float32 (channels-last). Weights already [Cin, Cout] bf16."""
    B, N, C = x_cl.shape
    C4 = w_qk.shape[1]

    flops = int(B * (2 * N * C * C4          # shared q/k projection
                     + 2 * N * C * C         # v projection
                     + 2 * N * N * C4        # energy
                     + 2 * N * N * C         # attn^T @ v
                     + 2 * N * C * C))       # trans_conv
    bytes_accessed = int(
        x_cl.size * 4 + x_cl.size * 4
        + (w_qk.size + w_v.size + w_t_folded.size) * 2
        + (b_v.size + b_t_folded.size) * 4)

    return pl.pallas_call(
        _sa_kernel,
        out_shape=jax.ShapeDtypeStruct((B, N, C), jnp.float32),
        grid=(B,),
        in_specs=[
            pl.BlockSpec((1, N, C), lambda b: (b, 0, 0)),   # x (per-batch block)
            pl.BlockSpec((C, C4), lambda b: (0, 0)),        # shared q/k weight
            pl.BlockSpec((C, C), lambda b: (0, 0)),         # v weight
            pl.BlockSpec((1, C), lambda b: (0, 0)),         # v bias
            pl.BlockSpec((C, C), lambda b: (0, 0)),         # trans weight (BN folded)
            pl.BlockSpec((1, C), lambda b: (0, 0)),         # trans bias  (BN folded)
        ],
        out_specs=pl.BlockSpec((1, N, C), lambda b: (b, 0, 0)),
        compiler_params=pltpu.CompilerParams(dimension_semantics=("parallel",)),
        cost_estimate=pl.CostEstimate(flops=flops,
                                      transcendentals=int(B * N * N),
                                      bytes_accessed=bytes_accessed),
    )(x_cl, w_qk, w_v, b_v, w_t_folded, b_t_folded)


# --------------------------------------------------------------------------
# Module wrapper (parameters + folding + reference)
# --------------------------------------------------------------------------

class SALayer:
    def __init__(self, channels, key=None, eps=1e-5):
        assert channels % 4 == 0
        self.channels = channels
        self.eps = eps
        if key is None:
            key = jax.random.PRNGKey(0)
        C, C4 = channels, channels // 4
        ks = jax.random.split(key, 9)
        bound = 1.0 / jnp.sqrt(jnp.float32(C))     # torch Conv1d default init range
        # torch-shaped weights: [out, in]
        self.w_qk = jax.random.uniform(ks[0], (C4, C), jnp.float32, -bound, bound)  # shared q/k
        self.w_v = jax.random.uniform(ks[1], (C, C), jnp.float32, -bound, bound)
        self.b_v = jax.random.uniform(ks[2], (C,), jnp.float32, -bound, bound)
        self.w_t = jax.random.uniform(ks[3], (C, C), jnp.float32, -bound, bound)
        self.b_t = jax.random.uniform(ks[4], (C,), jnp.float32, -bound, bound)
        # BatchNorm1d (eval-mode running stats), slightly randomized so the test is nontrivial
        self.bn_g = 1.0 + 0.1 * jax.random.normal(ks[5], (C,), jnp.float32)
        self.bn_b = 0.05 * jax.random.normal(ks[6], (C,), jnp.float32)
        self.bn_mu = 0.05 * jax.random.normal(ks[7], (C,), jnp.float32)
        self.bn_var = 1.0 + 0.1 * jax.nn.softplus(jax.random.normal(ks[8], (C,), jnp.float32))

    def _kernel_params(self):
        scale = self.bn_g / jnp.sqrt(self.bn_var + self.eps)
        w_qk = jnp.asarray(self.w_qk.T, jnp.bfloat16)                    # [C, C/4]
        w_v = jnp.asarray(self.w_v.T, jnp.bfloat16)                      # [C, C]
        b_v = self.b_v[None, :].astype(jnp.float32)                      # [1, C]
        w_t_f = (self.w_t.T * scale[None, :]).astype(jnp.bfloat16)       # BN scale folded in
        b_t_f = ((self.b_t - self.bn_mu) * scale + self.bn_b)[None, :].astype(jnp.float32)
        return w_qk, w_v, b_v, w_t_f, b_t_f

    def forward(self, x):
        # x: [B, C, N] channels-first (matches the PyTorch module interface)
        x_cl = jnp.transpose(x, (0, 2, 1)).astype(jnp.float32)           # [B, N, C]
        out_cl = sa_layer_pallas(x_cl, *self._kernel_params())
        return jnp.transpose(out_cl, (0, 2, 1))

    # Pure-JAX f32 reference mirroring the PyTorch ops (for verification).
    def reference(self, x):
        x_q = jnp.einsum('oc,bcn->bno', self.w_qk, x)                    # q_conv(x).permute(0,2,1)
        x_k = jnp.einsum('oc,bcn->bon', self.w_qk, x)                    # k_conv(x) (tied weights)
        x_v = jnp.einsum('oc,bcn->bon', self.w_v, x) + self.b_v[None, :, None]
        energy = jnp.einsum('bno,bom->bnm', x_q, x_k)
        attention = jax.nn.softmax(energy, axis=-1)
        attention = attention / (1e-9 + jnp.sum(attention, axis=1, keepdims=True))
        x_r = jnp.einsum('bcn,bnm->bcm', x_v, attention)
        t = jnp.einsum('oc,bcn->bon', self.w_t, x - x_r) + self.b_t[None, :, None]
        scale = self.bn_g / jnp.sqrt(self.bn_var + self.eps)
        y = (t - self.bn_mu[None, :, None]) * scale[None, :, None] + self.bn_b[None, :, None]
        y = jnp.maximum(y, 0.0)
        return x + y


# --------------------------------------------------------------------------

if __name__ == "__main__":
    key = jax.random.PRNGKey(0)
    k_x, k_p = jax.random.split(key)

    # Small but TPU-friendly shapes implied by the module (PCT SA layer):
    # B=2 (grid >= 2 for pipelining / megacore), C=128 channels (lane-dense, C/4=32), N=256 points.
    B, C, N = 2, 128, 256
    x = 0.5 * jax.random.normal(k_x, (B, C, N), jnp.float32)

    layer = SALayer(C, key=k_p)
    out = layer.forward(x)
    jax.block_until_ready(out)

    ref = layer.reference(x)
    assert out.shape == (B, C, N)
    max_err = float(jnp.max(jnp.abs(out - ref)))
    assert jnp.allclose(out, ref, atol=3e-2, rtol=3e-2), f"max abs err {max_err}"

    print("KERNEL_OK")
</pallas_src>

<mosaic_0001>
module attributes {stable_mosaic.version = 11 : i64} {
  func.func @_sa_kernel(%arg0: i32, %arg1: memref<1x256x128xf32, #tpu.memory_space<vmem>>, %arg2: memref<128x32xbf16, #tpu.memory_space<vmem>>, %arg3: memref<128x128xbf16, #tpu.memory_space<vmem>>, %arg4: memref<1x128xf32, #tpu.memory_space<vmem>>, %arg5: memref<128x128xbf16, #tpu.memory_space<vmem>>, %arg6: memref<1x128xf32, #tpu.memory_space<vmem>>, %arg7: memref<1x256x128xf32, #tpu.memory_space<vmem>>) attributes {dimension_semantics = [#tpu.dimension_semantics<parallel>], iteration_bounds = array<i64: 2>, scalar_prefetch = 0 : i64, scratch_operands = 0 : i64, tpu.core_type = #tpu.core_type<tc>, window_params = [{transform_indices = @transform_0, window_bounds = array<i64: 1, 256, 128>}, {pipeline_mode = #tpu.pipeline_mode<synchronous>, transform_indices = @transform_1, window_bounds = array<i64: 128, 32>}, {pipeline_mode = #tpu.pipeline_mode<synchronous>, transform_indices = @transform_2, window_bounds = array<i64: 128, 128>}, {pipeline_mode = #tpu.pipeline_mode<synchronous>, transform_indices = @transform_3, window_bounds = array<i64: 1, 128>}, {pipeline_mode = #tpu.pipeline_mode<synchronous>, transform_indices = @transform_4, window_bounds = array<i64: 128, 128>}, {pipeline_mode = #tpu.pipeline_mode<synchronous>, transform_indices = @transform_5, window_bounds = array<i64: 1, 128>}, {transform_indices = @transform_6, window_bounds = array<i64: 1, 256, 128>}]} {
    %c0 = arith.constant 0 : index
    %c0_0 = arith.constant 0 : index
    %c0_1 = arith.constant 0 : index
    %0 = vector.load %arg1[%c0, %c0_0, %c0_1] : memref<1x256x128xf32, #tpu.memory_space<vmem>>, vector<1x256x128xf32>
    %1 = vector.shape_cast %0 : vector<1x256x128xf32> to vector<256x128xf32>
    %2 = arith.truncf %1 : vector<256x128xf32> to vector<256x128xbf16>
    %c0_2 = arith.constant 0 : index
    %c0_3 = arith.constant 0 : index
    %3 = vector.load %arg2[%c0_2, %c0_3] : memref<128x32xbf16, #tpu.memory_space<vmem>>, vector<128x32xbf16>
    %cst = arith.constant dense<0.000000e+00> : vector<256x32xf32>
    %4 = tpu.matmul %2, %3, %cst {dimension_numbers = #tpu.dot_dimension_numbers<[1], [0], [0], [1], [0, 0, 1, 1], [], []>} : vector<256x128xbf16>, vector<128x32xbf16>, vector<256x32xf32> -> vector<256x32xf32>
    %c0_4 = arith.constant 0 : index
    %c0_5 = arith.constant 0 : index
    %5 = vector.load %arg3[%c0_4, %c0_5] : memref<128x128xbf16, #tpu.memory_space<vmem>>, vector<128x128xbf16>
    %cst_6 = arith.constant dense<0.000000e+00> : vector<256x128xf32>
    %6 = tpu.matmul %2, %5, %cst_6 {dimension_numbers = #tpu.dot_dimension_numbers<[1], [0], [0], [1], [0, 0, 1, 1], [], []>} : vector<256x128xbf16>, vector<128x128xbf16>, vector<256x128xf32> -> vector<256x128xf32>
    %c0_7 = arith.constant 0 : index
    %c0_8 = arith.constant 0 : index
    %7 = vector.load %arg4[%c0_7, %c0_8] : memref<1x128xf32, #tpu.memory_space<vmem>>, vector<1x128xf32>
    %8 = vector.broadcast %7 : vector<1x128xf32> to vector<256x128xf32>
    %9 = arith.addf %6, %8 : vector<256x128xf32>
    %10 = arith.truncf %4 : vector<256x32xf32> to vector<256x32xbf16>
    %cst_9 = arith.constant dense<0.000000e+00> : vector<256x256xf32>
    %11 = tpu.matmul %10, %10, %cst_9 {dimension_numbers = #tpu.dot_dimension_numbers<[1], [1], [0], [0], [0, 0, 1, 0], [], []>} : vector<256x32xbf16>, vector<256x32xbf16>, vector<256x256xf32> -> vector<256x256xf32>
    %cst_10 = arith.constant dense<0xFF800000> : vector<256xf32>
    %12 = vector.multi_reduction <maximumf>, %11, %cst_10 [1] : vector<256x256xf32> to vector<256xf32>
    %13 = vector.shape_cast %12 : vector<256xf32> to vector<256x1xf32>
    %14 = vector.broadcast %13 : vector<256x1xf32> to vector<256x256xf32>
    %15 = arith.subf %11, %14 : vector<256x256xf32>
    %16 = math.exp %15 : vector<256x256xf32>
    %cst_11 = arith.constant dense<0.000000e+00> : vector<256xf32>
    %17 = vector.multi_reduction <add>, %16, %cst_11 [1] : vector<256x256xf32> to vector<256xf32>
    %18 = vector.shape_cast %17 : vector<256xf32> to vector<256x1xf32>
    %19 = tpu.reciprocal %18 {approx = true} : vector<256x1xf32> -> vector<256x1xf32>
    %20 = vector.broadcast %19 : vector<256x1xf32> to vector<256x256xf32>
    %21 = arith.mulf %16, %20 : vector<256x256xf32>
    %cst_12 = arith.constant dense<0.000000e+00> : vector<256xf32>
    %22 = vector.multi_reduction <add>, %21, %cst_12 [0] : vector<256x256xf32> to vector<256xf32>
    %23 = vector.shape_cast %22 : vector<256xf32> to vector<1x256xf32>
    %cst_13 = arith.constant 9.99999971E-10 : f32
    %24 = vector.broadcast %cst_13 : f32 to vector<1x256xf32>
    %25 = arith.addf %24, %23 : vector<1x256xf32>
    %26 = tpu.reciprocal %25 {approx = true} : vector<1x256xf32> -> vector<1x256xf32>
    %27 = vector.broadcast %26 : vector<1x256xf32> to vector<256x256xf32>
    %28 = arith.mulf %21, %27 : vector<256x256xf32>
    %29 = arith.truncf %28 : vector<256x256xf32> to vector<256x256xbf16>
    %30 = arith.truncf %9 : vector<256x128xf32> to vector<256x128xbf16>
    %cst_14 = arith.constant dense<0.000000e+00> : vector<256x128xf32>
    %31 = tpu.matmul %29, %30, %cst_14 {dimension_numbers = #tpu.dot_dimension_numbers<[0], [0], [1], [1], [0, 1, 1, 1], [], []>} : vector<256x256xbf16>, vector<256x128xbf16>, vector<256x128xf32> -> vector<256x128xf32>
    %32 = arith.subf %1, %31 : vector<256x128xf32>
    %33 = arith.truncf %32 : vector<256x128xf32> to vector<256x128xbf16>
    %c0_15 = arith.constant 0 : index
    %c0_16 = arith.constant 0 : index
    %34 = vector.load %arg5[%c0_15, %c0_16] : memref<128x128xbf16, #tpu.memory_space<vmem>>, vector<128x128xbf16>
    %cst_17 = arith.constant dense<0.000000e+00> : vector<256x128xf32>
    %35 = tpu.matmul %33, %34, %cst_17 {dimension_numbers = #tpu.dot_dimension_numbers<[1], [0], [0], [1], [0, 0, 1, 1], [], []>} : vector<256x128xbf16>, vector<128x128xbf16>, vector<256x128xf32> -> vector<256x128xf32>
    %c0_18 = arith.constant 0 : index
    %c0_19 = arith.constant 0 : index
    %36 = vector.load %arg6[%c0_18, %c0_19] : memref<1x128xf32, #tpu.memory_space<vmem>>, vector<1x128xf32>
    %37 = vector.broadcast %36 : vector<1x128xf32> to vector<256x128xf32>
    %38 = arith.addf %35, %37 : vector<256x128xf32>
    %cst_20 = arith.constant 0.000000e+00 : f32
    %39 = vector.broadcast %cst_20 : f32 to vector<256x128xf32>
    %40 = arith.maximumf %38, %39 : vector<256x128xf32>
    %41 = arith.addf %1, %40 : vector<256x128xf32>
    %c0_21 = arith.constant 0 : index
    %c0_22 = arith.constant 0 : index
    %c0_23 = arith.constant 0 : index
    %42 = vector.load %arg7[%c0_21, %c0_22, %c0_23] : memref<1x256x128xf32, #tpu.memory_space<vmem>>, vector<1x256x128xf32>
    %43 = vector.shape_cast %42 : vector<1x256x128xf32> to vector<256x128xf32>
    %44 = vector.shape_cast %41 : vector<256x128xf32> to vector<1x256x128xf32>
    tpu.vector_store %arg7[%c0_21, %c0_22, %c0_23], %44 {strides = array<i32>} : memref<1x256x128xf32, #tpu.memory_space<vmem>>, vector<1x256x128xf32>,
    return
  }
  func.func @transform_0(%arg0: i32) -> (i32, i32, i32) {
    %c0_i32 = arith.constant 0 : i32
    %c0_i32_0 = arith.constant 0 : i32
    %c0_i32_1 = arith.constant 0 : i32
    return %arg0, %c0_i32, %c0_i32_0 : i32, i32, i32
  }
  func.func @transform_1(%arg0: i32) -> (i32, i32) {
    %c0_i32 = arith.constant 0 : i32
    %c0_i32_0 = arith.constant 0 : i32
    %c0_i32_1 = arith.constant 0 : i32
    return %c0_i32, %c0_i32_0 : i32, i32
  }
  func.func @transform_2(%arg0: i32) -> (i32, i32) {
    %c0_i32 = arith.constant 0 : i32
    %c0_i32_0 = arith.constant 0 : i32
    %c0_i32_1 = arith.constant 0 : i32
    return %c0_i32, %c0_i32_0 : i32, i32
  }
  func.func @transform_3(%arg0: i32) -> (i32, i32) {
    %c0_i32 = arith.constant 0 : i32
    %c0_i32_0 = arith.constant 0 : i32
    %c0_i32_1 = arith.constant 0 : i32
    return %c0_i32, %c0_i32_0 : i32, i32
  }
  func.func @transform_4(%arg0: i32) -> (i32, i32) {
    %c0_i32 = arith.constant 0 : i32
    %c0_i32_0 = arith.constant 0 : i32
    %c0_i32_1 = arith.constant 0 : i32
    return %c0_i32, %c0_i32_0 : i32, i32
  }
  func.func @transform_5(%arg0: i32) -> (i32, i32) {
    %c0_i32 = arith.constant 0 : i32
    %c0_i32_0 = arith.constant 0 : i32
    %c0_i32_1 = arith.constant 0 : i32
    return %c0_i32, %c0_i32_0 : i32, i32
  }
  func.func @transform_6(%arg0: i32) -> (i32, i32, i32) {
    %c0_i32 = arith.constant 0 : i32
    %c0_i32_0 = arith.constant 0 : i32
    %c0_i32_1 = arith.constant 0 : i32
    return %arg0, %c0_i32, %c0_i32_0 : i32, i32, i32
  }
}

</mosaic_0001>

<llo_original>
// kernel: tpu_custom_call.1
$region0: #{tpu_custom_call.1}
  #allocation0 [shape = 'u32[]', space=smem, size = 0x4, offset = 0x4, fixed_abs, tag = 'smem constant byte address 0x4 - core index']
  #allocation1 [shape = 'u32[144,128]{1,0:T(1,128)}', space=vmem, size = 0x12000, scoped, tag = 'internal scratch']
  %s0 = inlined_call_operand.hbm [shape: f32[2,256,128], index: 0, kind: input, shape index: {}]
  %s1 = inlined_call_operand.vmem [shape: bf16[128,32], index: 1, kind: input, shape index: {}]
  %s2 = inlined_call_operand.vmem [shape: bf16[128,128], index: 2, kind: input, shape index: {}]
  %s3 = inlined_call_operand.vmem [shape: f32[1,128], index: 3, kind: input, shape index: {}]
  %s4 = inlined_call_operand.hbm [shape: bf16[128,128], index: 4, kind: input, shape index: {}]
  %s5 = inlined_call_operand.vmem [shape: f32[1,128], index: 5, kind: input, shape index: {}]
  %s6 = inlined_call_operand.hbm [shape: f32[2,256,128], index: 6, kind: output, shape index: {}]
  %s7 = sld [smem:[#allocation0]]
  $region65: #{tpu_custom_call.1} parent=0
    _
  %s9 = ssub.s32 1, %s7
  %s10 = scalar_select 0, %s9, %s7
  $region1: #{tpu_custom_call.1} parent=0
    #allocation2 [shape = 'u8[262144]{0}', space=vmem, size = 0x40000, scoped, tag = 'input window, operand 0']
    #allocation3 [shape = 's32[2]{0}', space=sflag, size = 0x8, scoped, tag = 'scoped memory for tpu_custom_call.1']
    #allocation4 [shape = 's32[2]{0}', space=sflag, size = 0x8, scoped, tag = 'scoped memory for tpu_custom_call.1']
    #allocation5 [shape = 'u8[32768]{0}', space=vmem, size = 0x8000, scoped, tag = 'input window, operand 4, single buffered']
    #allocation6 [shape = 's32[1]{0}', space=sflag, size = 0x4, scoped, tag = 'scoped memory for tpu_custom_call.1']
    #allocation7 [shape = 'u8[262144]{0}', space=vmem, size = 0x40000, scoped, tag = 'output window, operand 0']
    %11 = vsyncpa [#allocation3], 0
    %s12 = scalar_lea.sflag [#allocation3], 1
    %13 = vsyncpa %s12, 0
    %14 = vsyncpa [#allocation6], 0
    %15 = vsyncpa [#allocation4], 0
    %s16 = scalar_lea.sflag [#allocation4], 1
    %17 = vsyncpa %s16, 0
    loop: start=0, step=1, limit=4
    $region2: #{tpu_custom_call.1} parent=1 // loop_pre_header
      _
    $region3: #{tpu_custom_call.1} parent=1 // loop_header
      %s19 = sphi 0, %s23
      %p20 = scmp.ge.s32.totalorder %s19, 4
      %s29 = sphi 0, %s31
      %s32 = sphi 0, %s29
      %s33 = sphi 0, %s32
      %s49 = sphi 0, %s33
      %s53 = sphi 0, %s53
      %s55 = sphi 0, %s53
      %s56 = sphi 0, %s55
      %s70 = sphi 0, %s56
      %s74 = sphi 0, %s74
      %s76 = sphi 0, %s74
      %s77 = sphi 0, %s76
      %s91 = sphi 0, %s77
      %s95 = sphi 0, %s95
      %s97 = sphi 0, %s95
      %s98 = sphi 0, %s97
      %s112 = sphi 0, %s98
      %s116 = sphi 0, %s116
      %s118 = sphi 0, %s116
      %s119 = sphi 0, %s118
      %s133 = sphi 0, %s119
      %s137 = sphi 0, %s137
      %s139 = sphi 0, %s137
      %s140 = sphi 0, %s139
      %s154 = sphi 0, %s140
      %s160 = sphi 0, %s162
      %s163 = sphi 0, %s160
      %s164 = sphi 0, %s163
      %s180 = sphi 0, %s164
    $region4: #{tpu_custom_call.1} parent=1 // loop_header_branch
      %22 = sbr.rel (%p20) target = $region8
    $region5: #{tpu_custom_call.1} parent=1 // loop_body
      %s24 = ssub.s32 %s19, 1
      %s25 = ssub.s32 %s19, 2
      %s26 = sadd.s32 %s19, 1
      %s27 = ssub.s32 %s19, %s26
      %p28 = scmp.eq.s32.totalorder %s27, 0
      %s30 = sadd.s32 %s29, 1
      %s31 = scalar_select %p28, %s29, %s30
      %p34 = pneg %p28
      %p35 = scmp.eq.s32.totalorder %s19, 1
      %p36 = por %p34, %p35
      %p37 = scmp.ne.s32.totalorder %s29, %s32
      %p38 = scmp.eq.s32.totalorder %s19, 0
      %p39 = por %p37, %p38
      %p40 = scmp.ne.s32.totalorder %s29, %s32
      %p41 = scmp.eq.s32.totalorder %s24, 1
      %p42 = por %p40, %p41
      %p43 = scmp.ne.s32.totalorder %s32, %s33
      %p44 = scmp.eq.s32.totalorder %s24, 0
      %p45 = por %p43, %p44
      %p46 = scmp.ne.s32.totalorder %s32, %s33
      %p47 = scmp.eq.s32.totalorder %s25, 1
      %p48 = por %p46, %p47
      %p50 = scmp.ne.s32.totalorder %s33, %s49
      %p51 = scmp.eq.s32.totalorder %s25, 0
      %p52 = por %p50, %p51
      %s54 = sadd.s32 %s53, 1
      %p57 = scmp.eq.s32.totalorder %s19, 1
      %p58 = scmp.ne.s32.totalorder %s53, %s55
      %p59 = scmp.eq.s32.totalorder %s19, 0
      %p60 = por %p58, %p59
      %p61 = scmp.ne.s32.totalorder %s53, %s55
      %p62 = scmp.eq.s32.totalorder %s24, 1
      %p63 = por %p61, %p62
      %p64 = scmp.ne.s32.totalorder %s55, %s56
      %p65 = scmp.eq.s32.totalorder %s24, 0
      %p66 = por %p64, %p65
      %p67 = scmp.ne.s32.totalorder %s55, %s56
      %p68 = scmp.eq.s32.totalorder %s25, 1
      %p69 = por %p67, %p68
      %p71 = scmp.ne.s32.totalorder %s56, %s70
      %p72 = scmp.eq.s32.totalorder %s25, 0
      %p73 = por %p71, %p72
      %s75 = sadd.s32 %s74, 1
      %p78 = scmp.eq.s32.totalorder %s19, 1
      %p79 = scmp.ne.s32.totalorder %s74, %s76
      %p80 = scmp.eq.s32.totalorder %s19, 0
      %p81 = por %p79, %p80
      %p82 = scmp.ne.s32.totalorder %s74, %s76
      %p83 = scmp.eq.s32.totalorder %s24, 1
      %p84 = por %p82, %p83
      %p85 = scmp.ne.s32.totalorder %s76, %s77
      %p86 = scmp.eq.s32.totalorder %s24, 0
      %p87 = por %p85, %p86
      %p88 = scmp.ne.s32.totalorder %s76, %s77
      %p89 = scmp.eq.s32.totalorder %s25, 1
      %p90 = por %p88, %p89
      %p92 = scmp.ne.s32.totalorder %s77, %s91
      %p93 = scmp.eq.s32.totalorder %s25, 0
      %p94 = por %p92, %p93
      %s96 = sadd.s32 %s95, 1
      %p99 = scmp.eq.s32.totalorder %s19, 1
      %p100 = scmp.ne.s32.totalorder %s95, %s97
      %p101 = scmp.eq.s32.totalorder %s19, 0
      %p102 = por %p100, %p101
      %p103 = scmp.ne.s32.totalorder %s95, %s97
      %p104 = scmp.eq.s32.totalorder %s24, 1
      %p105 = por %p103, %p104
      %p106 = scmp.ne.s32.totalorder %s97, %s98
      %p107 = scmp.eq.s32.totalorder %s24, 0
      %p108 = por %p106, %p107
      %p109 = scmp.ne.s32.totalorder %s97, %s98
      %p110 = scmp.eq.s32.totalorder %s25, 1
      %p111 = por %p109, %p110
      %p113 = scmp.ne.s32.totalorder %s98, %s112
      %p114 = scmp.eq.s32.totalorder %s25, 0
      %p115 = por %p113, %p114
      %s117 = sadd.s32 %s116, 1
      %p120 = scmp.eq.s32.totalorder %s19, 1
      %p121 = scmp.ne.s32.totalorder %s116, %s118
      %p122 = scmp.eq.s32.totalorder %s19, 0
      %p123 = por %p121, %p122
      %p124 = scmp.ne.s32.totalorder %s116, %s118
      %p125 = scmp.eq.s32.totalorder %s24, 1
      %p126 = por %p124, %p125
      %p127 = scmp.ne.s32.totalorder %s118, %s119
      %p128 = scmp.eq.s32.totalorder %s24, 0
      %p129 = por %p127, %p128
      %p130 = scmp.ne.s32.totalorder %s118, %s119
      %p131 = scmp.eq.s32.totalorder %s25, 1
      %p132 = por %p130, %p131
      %p134 = scmp.ne.s32.totalorder %s119, %s133
      %p135 = scmp.eq.s32.totalorder %s25, 0
      %p136 = por %p134, %p135
      %s138 = sadd.s32 %s137, 1
      %p141 = scmp.eq.s32.totalorder %s19, 1
      %p142 = scmp.ne.s32.totalorder %s137, %s139
      %p143 = scmp.eq.s32.totalorder %s19, 0
      %p144 = por %p142, %p143
      %p145 = scmp.ne.s32.totalorder %s137, %s139
      %p146 = scmp.eq.s32.totalorder %s24, 1
      %p147 = por %p145, %p146
      %p148 = scmp.ne.s32.totalorder %s139, %s140
      %p149 = scmp.eq.s32.totalorder %s24, 0
      %p150 = por %p148, %p149
      %p151 = scmp.ne.s32.totalorder %s139, %s140
      %p152 = scmp.eq.s32.totalorder %s25, 1
      %p153 = por %p151, %p152
      %p155 = scmp.ne.s32.totalorder %s140, %s154
      %p156 = scmp.eq.s32.totalorder %s25, 0
      %p157 = por %p155, %p156
      %s158 = ssub.s32 %s19, %s26
      %p159 = scmp.eq.s32.totalorder %s158, 0
      %s161 = sadd.s32 %s160, 1
      %s162 = scalar_select %p159, %s160, %s161
      %p165 = pneg %p159
      %p166 = scmp.eq.s32.totalorder %s19, 1
      %p167 = por %p165, %p166
      %p168 = scmp.ne.s32.totalorder %s160, %s163
      %p169 = scmp.eq.s32.totalorder %s19, 0
      %p170 = por %p168, %p169
      %p171 = scmp.ne.s32.totalorder %s160, %s163
      %p172 = scmp.eq.s32.totalorder %s24, 1
      %p173 = por %p171, %p172
      %p174 = scmp.ne.s32.totalorder %s163, %s164
      %p175 = scmp.eq.s32.totalorder %s24, 0
      %p176 = por %p174, %p175
      %p177 = scmp.ne.s32.totalorder %s163, %s164
      %p178 = scmp.eq.s32.totalorder %s25, 1
      %p179 = por %p177, %p178
      %p181 = scmp.ne.s32.totalorder %s164, %s180
      %p182 = scmp.eq.s32.totalorder %s25, 0
      %p183 = por %p181, %p182
      %p184 = scmp.le.s32.totalorder 1, %s19
      %p185 = scmp.lt.s32.totalorder %s19, 3
      %p186 = pnand %p184, %p185
      %p187 = pneg %p186
      // Predicated region
      $region9: #{tpu_custom_call.1} parent=5 // pred_check
        _
      $region10: #{tpu_custom_call.1} parent=5 // pred_check_branch
        %189 = sbr.rel (%p186) target = $region12
      $region11: #{tpu_custom_call.1} parent=5 // pred_region
        %s190 = ssub.s32 %s19, 1
        // Predicated region
        $region13: #{tpu_custom_call.1} parent=11 // pred_check
          %p191 = pneg %p66
        $region14: #{tpu_custom_call.1} parent=11 // pred_check_branch
          %193 = sbr.rel (%p191) target = $region16
        $region15: #{tpu_custom_call.1} parent=11 // pred_region
          _
        $region16: #{tpu_custom_call.1} parent=11 // pred_fallthru
          _
        // Predicated region
        $region17: #{tpu_custom_call.1} parent=11 // pred_check
          %p194 = pneg %p87
        $region18: #{tpu_custom_call.1} parent=11 // pred_check_branch
          %196 = sbr.rel (%p194) target = $region20
        $region19: #{tpu_custom_call.1} parent=11 // pred_region
          _
        $region20: #{tpu_custom_call.1} parent=11 // pred_fallthru
          _
        // Predicated region
        $region21: #{tpu_custom_call.1} parent=11 // pred_check
          %p197 = pneg %p108
        $region22: #{tpu_custom_call.1} parent=11 // pred_check_branch
          %199 = sbr.rel (%p197) target = $region24
        $region23: #{tpu_custom_call.1} parent=11 // pred_region
          _
        $region24: #{tpu_custom_call.1} parent=11 // pred_fallthru
          _
        // Predicated region
        $region25: #{tpu_custom_call.1} parent=11 // pred_check
          %p200 = pneg %p129
        $region26: #{tpu_custom_call.1} parent=11 // pred_check_branch
          %202 = sbr.rel (%p200) target = $region28
        $region27: #{tpu_custom_call.1} parent=11 // pred_region
          %s204 = ssub.s32 1024, 1024
          %205 = vsyncadd [#allocation6], %s204
          %s206 = sshll.u32 [#allocation5], 4
          %s207 = int_to_ptr.vmem [resolvable:$true] %s206
          %212 = dma.hbm_to_vmem [thread:$0]  %s4, 1024, %s207, [#allocation6], 64, 64, 4
        $region28: #{tpu_custom_call.1} parent=11 // pred_fallthru
          _
        // Predicated region
        $region29: #{tpu_custom_call.1} parent=11 // pred_check
          %p213 = pneg %p150
        $region30: #{tpu_custom_call.1} parent=11 // pred_check_branch
          %215 = sbr.rel (%p213) target = $region32
        $region31: #{tpu_custom_call.1} parent=11 // pred_region
          _
        $region32: #{tpu_custom_call.1} parent=11 // pred_fallthru
          _
      $region12: #{tpu_custom_call.1} parent=5 // pred_fallthru
        _
      %p216 = scmp.lt.s32.totalorder %s19, 2
      // Predicated region
      $region33: #{tpu_custom_call.1} parent=5 // pred_check
        %p217 = pneg %p216
      $region34: #{tpu_custom_call.1} parent=5 // pred_check_branch
        %219 = sbr.rel (%p217) target = $region36
      $region35: #{tpu_custom_call.1} parent=5 // pred_region
        // Predicated region
        $region37: #{tpu_custom_call.1} parent=35 // pred_check
          %p220 = pneg %p39
        $region38: #{tpu_custom_call.1} parent=35 // pred_check_branch
          %222 = sbr.rel (%p220) target = $region40
        $region39: #{tpu_custom_call.1} parent=35 // pred_region
          %s223 = sand.u32 %s29, 1
          %s224 = scalar_lea.sflag [#allocation3], %s223
          %s225 = sand.u32 %s29, 1
          %s226 = smul.addr %s225, 256
          %s227 = scalar_lea.vmem [#allocation2], %s226
          %s229 = ssub.s32 4096, 4096
          %230 = vsyncadd %s224, %s229
          %s231 = smul.addr %s19, 32
          %s232 = smul.addr %s231, 128
          %s233 = scalar_lea.hbm %s0, %s232
          %s234 = sshll.u32 %s227, 4
          %s235 = int_to_ptr.vmem [resolvable:$true] %s234
          %240 = dma.hbm_to_vmem [thread:$0]  %s233, 4096, %s235, %s224, 128, 128, 8
        $region40: #{tpu_custom_call.1} parent=35 // pred_fallthru
          _
      $region36: #{tpu_custom_call.1} parent=5 // pred_fallthru
        _
      %p241 = scmp.le.s32.totalorder 1, %s19
      %p242 = scmp.lt.s32.totalorder %s19, 3
      %p243 = pnand %p241, %p242
      %p244 = pneg %p243
      // Predicated region
      $region41: #{tpu_custom_call.1} parent=5 // pred_check
        _
      $region42: #{tpu_custom_call.1} parent=5 // pred_check_branch
        %246 = sbr.rel (%p243) target = $region44
      $region43: #{tpu_custom_call.1} parent=5 // pred_region
        %s247 = ssub.s32 %s19, 1
        %s248 = sand.u32 %s32, 1
        %s249 = scalar_lea.sflag [#allocation3], %s248
        %s250 = sand.u32 %s32, 1
        %s251 = smul.addr %s250, 256
        %s252 = scalar_lea.vmem [#allocation2], %s251
        // Predicated region
        $region45: #{tpu_custom_call.1} parent=43 // pred_check
          %p253 = pneg %p45
        $region46: #{tpu_custom_call.1} parent=43 // pred_check_branch
          %255 = sbr.rel (%p253) target = $region48
        $region47: #{tpu_custom_call.1} parent=43 // pred_region
          %256 = dma.done %s249, 4096
        $region48: #{tpu_custom_call.1} parent=43 // pred_fallthru
          _
        // Predicated region
        $region49: #{tpu_custom_call.1} parent=43 // pred_check
          %p257 = pneg %p129
        $region50: #{tpu_custom_call.1} parent=43 // pred_check_branch
          %259 = sbr.rel (%p257) target = $region52
        $region51: #{tpu_custom_call.1} parent=43 // pred_region
          %260 = dma.done [#allocation6], 1024
        $region52: #{tpu_custom_call.1} parent=43 // pred_fallthru
          _
        %s261 = sand.u32 %s32, 1
        %s262 = scalar_lea.sflag [#allocation3], %s261
        %s263 = sand.u32 %s32, 1
        %s264 = smul.addr %s263, 256
        %s265 = scalar_lea.vmem [#allocation2], %s264
        %p266 = pneg %p45
        %p267 = pneg %p42
        %p268 = pneg %p66
        %p269 = pneg %p63
        %p270 = pneg %p87
        %p271 = pneg %p84
        %p272 = pneg %p108
        %p273 = pneg %p105
        %p274 = pneg %p129
        %p275 = pneg %p126
        %p276 = pneg %p150
        %p277 = pneg %p147
        %p278 = pneg %p176
        %p279 = pneg %p173
        %s280 = sand.u32 %s163, 1
        %s281 = scalar_lea.sflag [#allocation4], %s280
        %s282 = sand.u32 %s163, 1
        %s283 = smul.addr %s282, 256
        %s284 = scalar_lea.vmem [#allocation7], %s283
        %v286 = vld [vmem:[%s252] sm:$0xff]
        %v287 = vld [vmem:[%s252 + $0x8] sm:$0xff]
        %v288 = vld [vmem:[%s252 + $0x10] sm:$0xff]
        %v289 = vld [vmem:[%s252 + $0x18] sm:$0xff]
        %v290 = vld [vmem:[%s252 + $0x20] sm:$0xff]
        %v291 = vld [vmem:[%s252 + $0x28] sm:$0xff]
        %v292 = vld [vmem:[%s252 + $0x30] sm:$0xff]
        %v293 = vld [vmem:[%s252 + $0x38] sm:$0xff]
        %v294 = vld [vmem:[%s252 + $0x40] sm:$0xff]
        %v295 = vld [vmem:[%s252 + $0x48] sm:$0xff]
        %v296 = vld [vmem:[%s252 + $0x50] sm:$0xff]
        %v297 = vld [vmem:[%s252 + $0x58] sm:$0xff]
        %v298 = vld [vmem:[%s252 + $0x60] sm:$0xff]
        %v299 = vld [vmem:[%s252 + $0x68] sm:$0xff]
        %v300 = vld [vmem:[%s252 + $0x70] sm:$0xff]
        %v301 = vld [vmem:[%s252 + $0x78] sm:$0xff]
        %v302 = vld [vmem:[%s252 + $0x80] sm:$0xff]
        %v303 = vld [vmem:[%s252 + $0x88] sm:$0xff]
        %v304 = vld [vmem:[%s252 + $0x90] sm:$0xff]
        %v305 = vld [vmem:[%s252 + $0x98] sm:$0xff]
        %v306 = vld [vmem:[%s252 + $0xa0] sm:$0xff]
        %v307 = vld [vmem:[%s252 + $0xa8] sm:$0xff]
        %v308 = vld [vmem:[%s252 + $0xb0] sm:$0xff]
        %v309 = vld [vmem:[%s252 + $0xb8] sm:$0xff]
        %v310 = vld [vmem:[%s252 + $0xc0] sm:$0xff]
        %v311 = vld [vmem:[%s252 + $0xc8] sm:$0xff]
        %v312 = vld [vmem:[%s252 + $0xd0] sm:$0xff]
        %v313 = vld [vmem:[%s252 + $0xd8] sm:$0xff]
        %v314 = vld [vmem:[%s252 + $0xe0] sm:$0xff]
        %v315 = vld [vmem:[%s252 + $0xe8] sm:$0xff]
        %v316 = vld [vmem:[%s252 + $0xf0] sm:$0xff]
        %v317 = vld [vmem:[%s252 + $0xf8] sm:$0xff]
        %v318 = vpack.c.bf16 %v287, %v286
        %v319 = vpack.c.bf16 %v289, %v288
        %v320 = vpack.c.bf16 %v291, %v290
        %v321 = vpack.c.bf16 %v293, %v292
        %v322 = vpack.c.bf16 %v295, %v294
        %v323 = vpack.c.bf16 %v297, %v296
        %v324 = vpack.c.bf16 %v299, %v298
        %v325 = vpack.c.bf16 %v301, %v300
        %v326 = vpack.c.bf16 %v303, %v302
        %v327 = vpack.c.bf16 %v305, %v304
        %v328 = vpack.c.bf16 %v307, %v306
        %v329 = vpack.c.bf16 %v309, %v308
        %v330 = vpack.c.bf16 %v311, %v310
        %v331 = vpack.c.bf16 %v313, %v312
        %v332 = vpack.c.bf16 %v315, %v314
        %v333 = vpack.c.bf16 %v317, %v316
        %v334 = vld [vmem:[%s1] sm:$0xf]
        %v335 = vld [vmem:[%s1 + $0x4] sm:$0xf]
        %v336 = vld [vmem:[%s1 + $0x8] sm:$0xf]
        %v337 = vld [vmem:[%s1 + $0xc] sm:$0xf]
        %v338 = vld [vmem:[%s1 + $0x10] sm:$0xf]
        %v339 = vld [vmem:[%s1 + $0x14] sm:$0xf]
        %v340 = vld [vmem:[%s1 + $0x18] sm:$0xf]
        %v341 = vld [vmem:[%s1 + $0x1c] sm:$0xf]
        %v342 = vld [vmem:[%s1 + $0x20] sm:$0xf]
        %v343 = vld [vmem:[%s1 + $0x24] sm:$0xf]
        %v344 = vld [vmem:[%s1 + $0x28] sm:$0xf]
        %v345 = vld [vmem:[%s1 + $0x2c] sm:$0xf]
        %v346 = vld [vmem:[%s1 + $0x30] sm:$0xf]
        %v347 = vld [vmem:[%s1 + $0x34] sm:$0xf]
        %v348 = vld [vmem:[%s1 + $0x38] sm:$0xf]
        %v349 = vld [vmem:[%s1 + $0x3c] sm:$0xf]
        %v366 = vunpack.c.l.b16 %v334
        %v367 = vunpack.c.l.b16 %v335
        %v368 = vunpack.c.l.b16 %v336
        %v369 = vunpack.c.l.b16 %v337
        %v370 = vunpack.c.l.b16 %v338
        %v371 = vunpack.c.l.b16 %v339
        %v372 = vunpack.c.l.b16 %v340
        %v373 = vunpack.c.l.b16 %v341
        %v374 = vunpack.c.l.b16 %v342
        %v375 = vunpack.c.l.b16 %v343
        %v376 = vunpack.c.l.b16 %v344
        %v377 = vunpack.c.l.b16 %v345
        %v378 = vunpack.c.l.b16 %v346
        %v379 = vunpack.c.l.b16 %v347
        %v380 = vunpack.c.l.b16 %v348
        %v381 = vunpack.c.l.b16 %v349
        %v382 = vpack.c.b16 %v367, %v366
        %v383 = vpack.c.b16 %v369, %v368
        %v384 = vpack.c.b16 %v371, %v370
        %v385 = vpack.c.b16 %v373, %v372
        %v386 = vpack.c.b16 %v375, %v374
        %v387 = vpack.c.b16 %v377, %v376
        %v388 = vpack.c.b16 %v379, %v378
        %v389 = vpack.c.b16 %v381, %v380
        %398 = vmatprep.subr.bf16.mxu0 0
        %399 = vmatpush1.bf16.msra.mxu0 %v382
        %400 = vmatprep.subr.bf16.mxu0 0
        %401 = vmatpush1.bf16.msra.mxu0 %v383
        %402 = vmatprep.subr.bf16.mxu0 0
        %403 = vmatpush1.bf16.msra.mxu0 %v384
        %404 = vmatprep.subr.bf16.mxu0 0
        %405 = vmatpush1.bf16.msra.mxu0 %v385
        %406 = vmatprep.subr.bf16.mxu0 0
        %407 = vmatpush1.bf16.msra.mxu0 %v386
        %408 = vmatprep.subr.bf16.mxu0 0
        %409 = vmatpush1.bf16.msra.mxu0 %v387
        %410 = vmatprep.subr.bf16.mxu0 0
        %411 = vmatpush1.bf16.msra.mxu0 %v388
        %412 = vmatprep.subr.bf16.mxu0 0
        %413 = vmatpush1.bf16.msra.mxu0 %v389
        %414 = vmatprep.subr.bf16.mxu0 0
        %415 = vmatpush1.bf16.msra.mxu0 0
        %416 = vmatprep.subr.bf16.mxu0 0
        %417 = vmatpush1.bf16.msra.mxu0 0
        %418 = vmatprep.subr.bf16.mxu0 0
        %419 = vmatpush1.bf16.msra.mxu0 0
        %420 = vmatprep.subr.bf16.mxu0 0
        %421 = vmatpush1.bf16.msra.mxu0 0
        %422 = vmatprep.subr.bf16.mxu0 0
        %423 = vmatpush1.bf16.msra.mxu0 0
        %424 = vmatprep.subr.bf16.mxu0 0
        %425 = vmatpush1.bf16.msra.mxu0 0
        %426 = vmatprep.subr.bf16.mxu0 0
        %427 = vmatpush1.bf16.msra.mxu0 0
        %428 = vmatprep.subr.bf16.mxu0 0
        %429 = vmatpush1.bf16.msra.mxu0 0
        %430 = vmatprep.mubr.bf16.mxu0 0
        %431 = vmatmul.mubr.bf16.gmra.mrb[0].mxu0 %v318
        %v432 = vpop.f32.mrb[0].mxu0
        %v433 = vadd.f32 0.0, %v432
        %v434 = vpop.f32.mrb[0].mxu0
        %v435 = vpop.f32.mrb[0].mxu0
        %v436 = vadd.f32 0.0, %v435
        %v437 = vpop.f32.mrb[0].mxu0
        %438 = vmatprep.mubr.bf16.mxu0 0
        %439 = vmatmul.mubr.bf16.gmra.mrb[0].mxu0 %v319
        %v440 = vpop.f32.mrb[0].mxu0
        %v441 = vadd.f32 0.0, %v440
        %v442 = vpop.f32.mrb[0].mxu0
        %v443 = vpop.f32.mrb[0].mxu0
        %v444 = vadd.f32 0.0, %v443
        %v445 = vpop.f32.mrb[0].mxu0
        %446 = vmatprep.mubr.bf16.mxu0 0
        %447 = vmatmul.mubr.bf16.gmra.mrb[0].mxu0 %v320
        %v448 = vpop.f32.mrb[0].mxu0
        %v449 = vadd.f32 0.0, %v448
        %v450 = vpop.f32.mrb[0].mxu0
        %v451 = vpop.f32.mrb[0].mxu0
        %v452 = vadd.f32 0.0, %v451
        %v453 = vpop.f32.mrb[0].mxu0
        %454 = vmatprep.mubr.bf16.mxu0 0
        %455 = vmatmul.mubr.bf16.gmra.mrb[0].mxu0 %v321
        %v456 = vpop.f32.mrb[0].mxu0
        %v457 = vadd.f32 0.0, %v456
        %v458 = vpop.f32.mrb[0].mxu0
        %v459 = vpop.f32.mrb[0].mxu0
        %v460 = vadd.f32 0.0, %v459
        %v461 = vpop.f32.mrb[0].mxu0
        %462 = vmatprep.mubr.bf16.mxu0 0
        %463 = vmatmul.mubr.bf16.gmra.mrb[0].mxu0 %v322
        %v464 = vpop.f32.mrb[0].mxu0
        %v465 = vadd.f32 0.0, %v464
        %v466 = vpop.f32.mrb[0].mxu0
        %v467 = vpop.f32.mrb[0].mxu0
        %v468 = vadd.f32 0.0, %v467
        %v469 = vpop.f32.mrb[0].mxu0
        %470 = vmatprep.mubr.bf16.mxu0 0
        %471 = vmatmul.mubr.bf16.gmra.mrb[0].mxu0 %v323
        %v472 = vpop.f32.mrb[0].mxu0
        %v473 = vadd.f32 0.0, %v472
        %v474 = vpop.f32.mrb[0].mxu0
        %v475 = vpop.f32.mrb[0].mxu0
        %v476 = vadd.f32 0.0, %v475
        %v477 = vpop.f32.mrb[0].mxu0
        %478 = vmatprep.mubr.bf16.mxu0 0
        %479 = vmatmul.mubr.bf16.gmra.mrb[0].mxu0 %v324
        %v480 = vpop.f32.mrb[0].mxu0
        %v481 = vadd.f32 0.0, %v480
        %v482 = vpop.f32.mrb[0].mxu0
        %v483 = vpop.f32.mrb[0].mxu0
        %v484 = vadd.f32 0.0, %v483
        %v485 = vpop.f32.mrb[0].mxu0
        %486 = vmatprep.mubr.bf16.mxu0 0
        %487 = vmatmul.mubr.bf16.gmra.mrb[0].mxu0 %v325
        %v488 = vpop.f32.mrb[0].mxu0
        %v489 = vadd.f32 0.0, %v488
        %v490 = vpop.f32.mrb[0].mxu0
        %v491 = vpop.f32.mrb[0].mxu0
        %v492 = vadd.f32 0.0, %v491
        %v493 = vpop.f32.mrb[0].mxu0
        %494 = vmatprep.mubr.bf16.mxu0 0
        %495 = vmatmul.mubr.bf16.gmra.mrb[0].mxu0 %v326
        %v496 = vpop.f32.mrb[0].mxu0
        %v497 = vadd.f32 0.0, %v496
        %v498 = vpop.f32.mrb[0].mxu0
        %v499 = vpop.f32.mrb[0].mxu0
        %v500 = vadd.f32 0.0, %v499
        %v501 = vpop.f32.mrb[0].mxu0
        %502 = vmatprep.mubr.bf16.mxu0 0
        %503 = vmatmul.mubr.bf16.gmra.mrb[0].mxu0 %v327
        %v504 = vpop.f32.mrb[0].mxu0
        %v505 = vadd.f32 0.0, %v504
        %v506 = vpop.f32.mrb[0].mxu0
        %v507 = vpop.f32.mrb[0].mxu0
        %v508 = vadd.f32 0.0, %v507
        %v509 = vpop.f32.mrb[0].mxu0
        %510 = vmatprep.mubr.bf16.mxu0 0
        %511 = vmatmul.mubr.bf16.gmra.mrb[0].mxu0 %v328
        %v512 = vpop.f32.mrb[0].mxu0
        %v513 = vadd.f32 0.0, %v512
        %v514 = vpop.f32.mrb[0].mxu0
        %v515 = vpop.f32.mrb[0].mxu0
        %v516 = vadd.f32 0.0, %v515
        %v517 = vpop.f32.mrb[0].mxu0
        %518 = vmatprep.mubr.bf16.mxu0 0
        %519 = vmatmul.mubr.bf16.gmra.mrb[0].mxu0 %v329
        %v520 = vpop.f32.mrb[0].mxu0
        %v521 = vadd.f32 0.0, %v520
        %v522 = vpop.f32.mrb[0].mxu0
        %v523 = vpop.f32.mrb[0].mxu0
        %v524 = vadd.f32 0.0, %v523
        %v525 = vpop.f32.mrb[0].mxu0
        %526 = vmatprep.mubr.bf16.mxu0 0
        %527 = vmatmul.mubr.bf16.gmra.mrb[0].mxu0 %v330
        %v528 = vpop.f32.mrb[0].mxu0
        %v529 = vadd.f32 0.0, %v528
        %v530 = vpop.f32.mrb[0].mxu0
        %v531 = vpop.f32.mrb[0].mxu0
        %v532 = vadd.f32 0.0, %v531
        %v533 = vpop.f32.mrb[0].mxu0
        %534 = vmatprep.mubr.bf16.mxu0 0
        %535 = vmatmul.mubr.bf16.gmra.mrb[0].mxu0 %v331
        %v536 = vpop.f32.mrb[0].mxu0
        %v537 = vadd.f32 0.0, %v536
        %v538 = vpop.f32.mrb[0].mxu0
        %v539 = vpop.f32.mrb[0].mxu0
        %v540 = vadd.f32 0.0, %v539
        %v541 = vpop.f32.mrb[0].mxu0
        %542 = vmatprep.mubr.bf16.mxu0 0
        %543 = vmatmul.mubr.bf16.gmra.mrb[0].mxu0 %v332
        %v544 = vpop.f32.mrb[0].mxu0
        %v545 = vadd.f32 0.0, %v544
        %v546 = vpop.f32.mrb[0].mxu0
        %v547 = vpop.f32.mrb[0].mxu0
        %v548 = vadd.f32 0.0, %v547
        %v549 = vpop.f32.mrb[0].mxu0
        %550 = vmatprep.mubr.bf16.mxu0 0
        %551 = vmatmul.mubr.bf16.gmra.mrb[0].mxu0 %v333
        %v552 = vpop.f32.mrb[0].mxu0
        %v553 = vadd.f32 0.0, %v552
        %v554 = vpop.f32.mrb[0].mxu0
        %v555 = vpop.f32.mrb[0].mxu0
        %v556 = vadd.f32 0.0, %v555
        %v557 = vpop.f32.mrb[0].mxu0
        %558 = vdwg.mxu0
        %v559 = vld [vmem:[%s2] sm:$0xf]
        %v560 = vld [vmem:[%s2 + $0x4] sm:$0xf]
        %v561 = vld [vmem:[%s2 + $0x8] sm:$0xf]
        %v562 = vld [vmem:[%s2 + $0xc] sm:$0xf]
        %v563 = vld [vmem:[%s2 + $0x10] sm:$0xf]
        %v564 = vld [vmem:[%s2 + $0x14] sm:$0xf]
        %v565 = vld [vmem:[%s2 + $0x18] sm:$0xf]
        %v566 = vld [vmem:[%s2 + $0x1c] sm:$0xf]
        %v567 = vld [vmem:[%s2 + $0x20] sm:$0xf]
        %v568 = vld [vmem:[%s2 + $0x24] sm:$0xf]
        %v569 = vld [vmem:[%s2 + $0x28] sm:$0xf]
        %v570 = vld [vmem:[%s2 + $0x2c] sm:$0xf]
        %v571 = vld [vmem:[%s2 + $0x30] sm:$0xf]
        %v572 = vld [vmem:[%s2 + $0x34] sm:$0xf]
        %v573 = vld [vmem:[%s2 + $0x38] sm:$0xf]
        %v574 = vld [vmem:[%s2 + $0x3c] sm:$0xf]
        %v575 = vld [vmem:[%s3] sm:$0x1]
        %v577 = vlaneseq
        %v578 = vshrl.u32 %v577, 7
        %v579 = vsub.s32 0, %v578
        %v580 = vrot.slane %v575, %v579
        %v598 = vunpack.c.l.b16 %v559
        %v599 = vunpack.c.l.b16 %v560
        %v600 = vunpack.c.l.b16 %v561
        %v601 = vunpack.c.l.b16 %v562
        %v602 = vunpack.c.l.b16 %v563
        %v603 = vunpack.c.l.b16 %v564
        %v604 = vunpack.c.l.b16 %v565
        %v605 = vunpack.c.l.b16 %v566
        %v606 = vunpack.c.l.b16 %v567
        %v607 = vunpack.c.l.b16 %v568
        %v608 = vunpack.c.l.b16 %v569
        %v609 = vunpack.c.l.b16 %v570
        %v610 = vunpack.c.l.b16 %v571
        %v611 = vunpack.c.l.b16 %v572
        %v612 = vunpack.c.l.b16 %v573
        %v613 = vunpack.c.l.b16 %v574
        %v614 = vpack.c.b16 %v599, %v598
        %v615 = vpack.c.b16 %v601, %v600
        %v616 = vpack.c.b16 %v603, %v602
        %v617 = vpack.c.b16 %v605, %v604
        %v618 = vpack.c.b16 %v607, %v606
        %v619 = vpack.c.b16 %v609, %v608
        %v620 = vpack.c.b16 %v611, %v610
        %v621 = vpack.c.b16 %v613, %v612
        %630 = vmatprep.subr.bf16.mxu0 0
        %631 = vmatpush1.bf16.msra.mxu0 %v614
        %632 = vmatprep.subr.bf16.mxu0 0
        %633 = vmatpush1.bf16.msra.mxu0 %v615
        %634 = vmatprep.subr.bf16.mxu0 0
        %635 = vmatpush1.bf16.msra.mxu0 %v616
        %636 = vmatprep.subr.bf16.mxu0 0
        %637 = vmatpush1.bf16.msra.mxu0 %v617
        %638 = vmatprep.subr.bf16.mxu0 0
        %639 = vmatpush1.bf16.msra.mxu0 %v618
        %640 = vmatprep.subr.bf16.mxu0 0
        %641 = vmatpush1.bf16.msra.mxu0 %v619
        %642 = vmatprep.subr.bf16.mxu0 0
        %643 = vmatpush1.bf16.msra.mxu0 %v620
        %644 = vmatprep.subr.bf16.mxu0 0
        %645 = vmatpush1.bf16.msra.mxu0 %v621
        %646 = vmatprep.subr.bf16.mxu0 0
        %647 = vmatpush1.bf16.msra.mxu0 0
        %648 = vmatprep.subr.bf16.mxu0 0
        %649 = vmatpush1.bf16.msra.mxu0 0
        %650 = vmatprep.subr.bf16.mxu0 0
        %651 = vmatpush1.bf16.msra.mxu0 0
        %652 = vmatprep.subr.bf16.mxu0 0
        %653 = vmatpush1.bf16.msra.mxu0 0
        %654 = vmatprep.subr.bf16.mxu0 0
        %655 = vmatpush1.bf16.msra.mxu0 0
        %656 = vmatprep.subr.bf16.mxu0 0
        %657 = vmatpush1.bf16.msra.mxu0 0
        %658 = vmatprep.subr.bf16.mxu0 0
        %659 = vmatpush1.bf16.msra.mxu0 0
        %660 = vmatprep.subr.bf16.mxu0 0
        %661 = vmatpush1.bf16.msra.mxu0 0
        %662 = vmatprep.mubr.bf16.mxu0 0
        %663 = vmatmul.mubr.bf16.gmra.mrb[0].mxu0 %v318
        %v664 = vpop.f32.mrb[0].mxu0
        %v665 = vadd.f32 %v580, %v664
        %v666 = vpop.f32.mrb[0].mxu0
        %v667 = vpop.f32.mrb[0].mxu0
        %v668 = vadd.f32 %v580, %v667
        %v669 = vpop.f32.mrb[0].mxu0
        %670 = vmatprep.mubr.bf16.mxu0 0
        %671 = vmatmul.mubr.bf16.gmra.mrb[0].mxu0 %v319
        %v672 = vpop.f32.mrb[0].mxu0
        %v673 = vadd.f32 %v580, %v672
        %v674 = vpop.f32.mrb[0].mxu0
        %v675 = vpop.f32.mrb[0].mxu0
        %v676 = vadd.f32 %v580, %v675
        %v677 = vpop.f32.mrb[0].mxu0
        %678 = vmatprep.mubr.bf16.mxu0 0
        %679 = vmatmul.mubr.bf16.gmra.mrb[0].mxu0 %v320
        %v680 = vpop.f32.mrb[0].mxu0
        %v681 = vadd.f32 %v580, %v680
        %v682 = vpop.f32.mrb[0].mxu0
        %v683 = vpop.f32.mrb[0].mxu0
        %v684 = vadd.f32 %v580, %v683
        %v685 = vpop.f32.mrb[0].mxu0
        %686 = vmatprep.mubr.bf16.mxu0 0
        %687 = vmatmul.mubr.bf16.gmra.mrb[0].mxu0 %v321
        %v688 = vpop.f32.mrb[0].mxu0
        %v689 = vadd.f32 %v580, %v688
        %v690 = vpop.f32.mrb[0].mxu0
        %v691 = vpop.f32.mrb[0].mxu0
        %v692 = vadd.f32 %v580, %v691
        %v693 = vpop.f32.mrb[0].mxu0
        %694 = vmatprep.mubr.bf16.mxu0 0
        %695 = vmatmul.mubr.bf16.gmra.mrb[0].mxu0 %v322
        %v696 = vpop.f32.mrb[0].mxu0
        %v697 = vadd.f32 %v580, %v696
        %v698 = vpop.f32.mrb[0].mxu0
        %v699 = vpop.f32.mrb[0].mxu0
        %v700 = vadd.f32 %v580, %v699
        %v701 = vpop.f32.mrb[0].mxu0
        %702 = vmatprep.mubr.bf16.mxu0 0
        %703 = vmatmul.mubr.bf16.gmra.mrb[0].mxu0 %v323
        %v704 = vpop.f32.mrb[0].mxu0
        %v705 = vadd.f32 %v580, %v704
        %v706 = vpop.f32.mrb[0].mxu0
        %v707 = vpop.f32.mrb[0].mxu0
        %v708 = vadd.f32 %v580, %v707
        %v709 = vpop.f32.mrb[0].mxu0
        %710 = vmatprep.mubr.bf16.mxu0 0
        %711 = vmatmul.mubr.bf16.gmra.mrb[0].mxu0 %v324
        %v712 = vpop.f32.mrb[0].mxu0
        %v713 = vadd.f32 %v580, %v712
        %v714 = vpop.f32.mrb[0].mxu0
        %v715 = vpop.f32.mrb[0].mxu0
        %v716 = vadd.f32 %v580, %v715
        %v717 = vpop.f32.mrb[0].mxu0
        %718 = vmatprep.mubr.bf16.mxu0 0
        %719 = vmatmul.mubr.bf16.gmra.mrb[0].mxu0 %v325
        %v720 = vpop.f32.mrb[0].mxu0
        %v721 = vadd.f32 %v580, %v720
        %v722 = vpop.f32.mrb[0].mxu0
        %v723 = vpop.f32.mrb[0].mxu0
        %v724 = vadd.f32 %v580, %v723
        %v725 = vpop.f32.mrb[0].mxu0
        %726 = vmatprep.mubr.bf16.mxu0 0
        %727 = vmatmul.mubr.bf16.gmra.mrb[0].mxu0 %v326
        %v728 = vpop.f32.mrb[0].mxu0
        %v729 = vadd.f32 %v580, %v728
        %v730 = vpop.f32.mrb[0].mxu0
        %v731 = vpop.f32.mrb[0].mxu0
        %v732 = vadd.f32 %v580, %v731
        %v733 = vpop.f32.mrb[0].mxu0
        %734 = vmatprep.mubr.bf16.mxu0 0
        %735 = vmatmul.mubr.bf16.gmra.mrb[0].mxu0 %v327
        %v736 = vpop.f32.mrb[0].mxu0
        %v737 = vadd.f32 %v580, %v736
        %v738 = vpop.f32.mrb[0].mxu0
        %v739 = vpop.f32.mrb[0].mxu0
        %v740 = vadd.f32 %v580, %v739
        %v741 = vpop.f32.mrb[0].mxu0
        %742 = vmatprep.mubr.bf16.mxu0 0
        %743 = vmatmul.mubr.bf16.gmra.mrb[0].mxu0 %v328
        %v744 = vpop.f32.mrb[0].mxu0
        %v745 = vadd.f32 %v580, %v744
        %v746 = vpop.f32.mrb[0].mxu0
        %v747 = vpop.f32.mrb[0].mxu0
        %v748 = vadd.f32 %v580, %v747
        %v749 = vpop.f32.mrb[0].mxu0
        %750 = vmatprep.mubr.bf16.mxu0 0
        %751 = vmatmul.mubr.bf16.gmra.mrb[0].mxu0 %v329
        %v752 = vpop.f32.mrb[0].mxu0
        %v753 = vadd.f32 %v580, %v752
        %v754 = vpop.f32.mrb[0].mxu0
        %v755 = vpop.f32.mrb[0].mxu0
        %v756 = vadd.f32 %v580, %v755
        %v757 = vpop.f32.mrb[0].mxu0
        %758 = vmatprep.mubr.bf16.mxu0 0
        %759 = vmatmul.mubr.bf16.gmra.mrb[0].mxu0 %v330
        %v760 = vpop.f32.mrb[0].mxu0
        %v761 = vadd.f32 %v580, %v760
        %v762 = vpop.f32.mrb[0].mxu0
        %v763 = vpop.f32.mrb[0].mxu0
        %v764 = vadd.f32 %v580, %v763
        %v765 = vpop.f32.mrb[0].mxu0
        %766 = vmatprep.mubr.bf16.mxu0 0
        %767 = vmatmul.mubr.bf16.gmra.mrb[0].mxu0 %v331
        %v768 = vpop.f32.mrb[0].mxu0
        %v769 = vadd.f32 %v580, %v768
        %v770 = vpop.f32.mrb[0].mxu0
        %v771 = vpop.f32.mrb[0].mxu0
        %v772 = vadd.f32 %v580, %v771
        %v773 = vpop.f32.mrb[0].mxu0
        %774 = vmatprep.mubr.bf16.mxu0 0
        %775 = vmatmul.mubr.bf16.gmra.mrb[0].mxu0 %v332
        %v776 = vpop.f32.mrb[0].mxu0
        %v777 = vadd.f32 %v580, %v776
        %v778 = vpop.f32.mrb[0].mxu0
        %v779 = vpop.f32.mrb[0].mxu0
        %v780 = vadd.f32 %v580, %v779
        %v781 = vpop.f32.mrb[0].mxu0
        %782 = vmatprep.mubr.bf16.mxu0 0
        %783 = vmatmul.mubr.bf16.gmra.mrb[0].mxu0 %v333
        %v784 = vpop.f32.mrb[0].mxu0
        %v785 = vadd.f32 %v580, %v784
        %v786 = vpop.f32.mrb[0].mxu0
        %v787 = vpop.f32.mrb[0].mxu0
        %v788 = vadd.f32 %v580, %v787
        %v789 = vpop.f32.mrb[0].mxu0
        %790 = vdwg.mxu0
        %v791 = vpack.c.bf16 %v436, %v433
        %v792 = vpack.c.bf16 %v444, %v441
        %v793 = vpack.c.bf16 %v452, %v449
        %v794 = vpack.c.bf16 %v460, %v457
        %v795 = vpack.c.bf16 %v468, %v465
        %v796 = vpack.c.bf16 %v476, %v473
        %v797 = vpack.c.bf16 %v484, %v481
        %v798 = vpack.c.bf16 %v492, %v489
        %v799 = vpack.c.bf16 %v500, %v497
        %v800 = vpack.c.bf16 %v508, %v505
        %v801 = vpack.c.bf16 %v516, %v513
        %v802 = vpack.c.bf16 %v524, %v521
        %v803 = vpack.c.bf16 %v532, %v529
        %v804 = vpack.c.bf16 %v540, %v537
        %v805 = vpack.c.bf16 %v548, %v545
        %v806 = vpack.c.bf16 %v556, %v553
        %vm807 = vcmask 261120
        %v809 = vsel %vm807, %v791, 0
        %v812 = vsel %vm807, %v792, 0
        %v815 = vsel %vm807, %v793, 0
        %v818 = vsel %vm807, %v794, 0
        %v821 = vsel %vm807, %v795, 0
        %v824 = vsel %vm807, %v796, 0
        %v827 = vsel %vm807, %v797, 0
        %v830 = vsel %vm807, %v798, 0
        %v833 = vsel %vm807, %v799, 0
        %v836 = vsel %vm807, %v800, 0
        %v839 = vsel %vm807, %v801, 0
        %v842 = vsel %vm807, %v802, 0
        %v845 = vsel %vm807, %v803, 0
        %v848 = vsel %vm807, %v804, 0
        %v851 = vsel %vm807, %v805, 0
        %v854 = vsel %vm807, %v806, 0
        %856 = vmatprep.subr.bf16.mxu0 0
        %857 = vmatpush1.bf16.xpose.msra.mxu0 %v809
        %858 = vmatprep.subr.bf16.mxu0 0
        %859 = vmatpush1.bf16.xpose.msra.mxu0 %v812
        %860 = vmatprep.subr.bf16.mxu0 0
        %861 = vmatpush1.bf16.xpose.msra.mxu0 %v815
        %862 = vmatprep.subr.bf16.mxu0 0
        %863 = vmatpush1.bf16.xpose.msra.mxu0 %v818
        %864 = vmatprep.subr.bf16.mxu0 0
        %865 = vmatpush1.bf16.xpose.msra.mxu0 %v821
        %866 = vmatprep.subr.bf16.mxu0 0
        %867 = vmatpush1.bf16.xpose.msra.mxu0 %v824
        %868 = vmatprep.subr.bf16.mxu0 0
        %869 = vmatpush1.bf16.xpose.msra.mxu0 %v827
        %870 = vmatprep.subr.bf16.mxu0 0
        %871 = vmatpush1.bf16.xpose.msra.mxu0 %v830
        %872 = vmatprep.subr.bf16.mxu0 0
        %873 = vmatpush1.bf16.xpose.msra.mxu0 %v833
        %874 = vmatprep.subr.bf16.mxu0 0
        %875 = vmatpush1.bf16.xpose.msra.mxu0 %v836
        %876 = vmatprep.subr.bf16.mxu0 0
        %877 = vmatpush1.bf16.xpose.msra.mxu0 %v839
        %878 = vmatprep.subr.bf16.mxu0 0
        %879 = vmatpush1.bf16.xpose.msra.mxu0 %v842
        %880 = vmatprep.subr.bf16.mxu0 0
        %881 = vmatpush1.bf16.xpose.msra.mxu0 %v845
        %882 = vmatprep.subr.bf16.mxu0 0
        %883 = vmatpush1.bf16.xpose.msra.mxu0 %v848
        %884 = vmatprep.subr.bf16.mxu0 0
        %885 = vmatpush1.bf16.xpose.msra.mxu0 %v851
        %886 = vmatprep.subr.bf16.mxu0 0
        %887 = vmatpush1.bf16.xpose.msra.mxu0 %v854
        %888 = vmatprep.mubr.bf16.mxu0 0
        %889 = vmatmul.mubr.bf16.gmra.mrb[0].mxu0 %v809
        %v890 = vpop.f32.mrb[0].mxu0
        %v891 = vadd.f32 0.0, %v890
        %v892 = vpop.f32.mrb[0].mxu0
        %v893 = vadd.f32 0.0, %v892
        %v894 = vpop.f32.mrb[0].mxu0
        %v895 = vadd.f32 0.0, %v894
        %v896 = vpop.f32.mrb[0].mxu0
        %v897 = vadd.f32 0.0, %v896
        %898 = vmatprep.mubr.bf16.mxu0 0
        %899 = vmatmul.mubr.bf16.gmra.mrb[0].mxu0 %v812
        %v900 = vpop.f32.mrb[0].mxu0
        %v901 = vadd.f32 0.0, %v900
        %v902 = vpop.f32.mrb[0].mxu0
        %v903 = vadd.f32 0.0, %v902
        %v904 = vpop.f32.mrb[0].mxu0
        %v905 = vadd.f32 0.0, %v904
        %v906 = vpop.f32.mrb[0].mxu0
        %v907 = vadd.f32 0.0, %v906
        %908 = vmatprep.mubr.bf16.mxu0 0
        %909 = vmatmul.mubr.bf16.gmra.mrb[0].mxu0 %v815
        %v910 = vpop.f32.mrb[0].mxu0
        %v911 = vadd.f32 0.0, %v910
        %v912 = vpop.f32.mrb[0].mxu0
        %v913 = vadd.f32 0.0, %v912
        %v914 = vpop.f32.mrb[0].mxu0
        %v915 = vadd.f32 0.0, %v914
        %v916 = vpop.f32.mrb[0].mxu0
        %v917 = vadd.f32 0.0, %v916
        %918 = vmatprep.mubr.bf16.mxu0 0
        %919 = vmatmul.mubr.bf16.gmra.mrb[0].mxu0 %v818
        %v920 = vpop.f32.mrb[0].mxu0
        %v921 = vadd.f32 0.0, %v920
        %v922 = vpop.f32.mrb[0].mxu0
        %v923 = vadd.f32 0.0, %v922
        %v924 = vpop.f32.mrb[0].mxu0
        %v925 = vadd.f32 0.0, %v924
        %v926 = vpop.f32.mrb[0].mxu0
        %v927 = vadd.f32 0.0, %v926
        %928 = vmatprep.mubr.bf16.mxu0 0
        %929 = vmatmul.mubr.bf16.gmra.mrb[0].mxu0 %v821
        %v930 = vpop.f32.mrb[0].mxu0
        %v931 = vadd.f32 0.0, %v930
        %v932 = vpop.f32.mrb[0].mxu0
        %v933 = vadd.f32 0.0, %v932
        %v934 = vpop.f32.mrb[0].mxu0
        %v935 = vadd.f32 0.0, %v934
        %v936 = vpop.f32.mrb[0].mxu0
        %v937 = vadd.f32 0.0, %v936
        %938 = vmatprep.mubr.bf16.mxu0 0
        %939 = vmatmul.mubr.bf16.gmra.mrb[0].mxu0 %v824
        %v940 = vpop.f32.mrb[0].mxu0
        %v941 = vadd.f32 0.0, %v940
        %v942 = vpop.f32.mrb[0].mxu0
        %v943 = vadd.f32 0.0, %v942
        %v944 = vpop.f32.mrb[0].mxu0
        %v945 = vadd.f32 0.0, %v944
        %v946 = vpop.f32.mrb[0].mxu0
        %v947 = vadd.f32 0.0, %v946
        %948 = vmatprep.mubr.bf16.mxu0 0
        %949 = vmatmul.mubr.bf16.gmra.mrb[0].mxu0 %v827
        %v950 = vpop.f32.mrb[0].mxu0
        %v951 = vadd.f32 0.0, %v950
        %v952 = vpop.f32.mrb[0].mxu0
        %v953 = vadd.f32 0.0, %v952
        %v954 = vpop.f32.mrb[0].mxu0
        %v955 = vadd.f32 0.0, %v954
        %v956 = vpop.f32.mrb[0].mxu0
        %v957 = vadd.f32 0.0, %v956
        %958 = vmatprep.mubr.bf16.mxu0 0
        %959 = vmatmul.mubr.bf16.gmra.mrb[0].mxu0 %v830
        %v960 = vpop.f32.mrb[0].mxu0
        %v961 = vadd.f32 0.0, %v960
        %v962 = vpop.f32.mrb[0].mxu0
        %v963 = vadd.f32 0.0, %v962
        %v964 = vpop.f32.mrb[0].mxu0
        %v965 = vadd.f32 0.0, %v964
        %v966 = vpop.f32.mrb[0].mxu0
        %v967 = vadd.f32 0.0, %v966
        %968 = vmatprep.mubr.bf16.mxu0 0
        %969 = vmatmul.mubr.bf16.gmra.mrb[0].mxu0 %v833
        %v970 = vpop.f32.mrb[0].mxu0
        %v971 = vadd.f32 0.0, %v970
        %v972 = vpop.f32.mrb[0].mxu0
        %v973 = vadd.f32 0.0, %v972
        %v974 = vpop.f32.mrb[0].mxu0
        %v975 = vadd.f32 0.0, %v974
        %v976 = vpop.f32.mrb[0].mxu0
        %v977 = vadd.f32 0.0, %v976
        %978 = vmatprep.mubr.bf16.mxu0 0
        %979 = vmatmul.mubr.bf16.gmra.mrb[0].mxu0 %v836
        %v980 = vpop.f32.mrb[0].mxu0
        %v981 = vadd.f32 0.0, %v980
        %v982 = vpop.f32.mrb[0].mxu0
        %v983 = vadd.f32 0.0, %v982
        %v984 = vpop.f32.mrb[0].mxu0
        %v985 = vadd.f32 0.0, %v984
        %v986 = vpop.f32.mrb[0].mxu0
        %v987 = vadd.f32 0.0, %v986
        %988 = vmatprep.mubr.bf16.mxu0 0
        %989 = vmatmul.mubr.bf16.gmra.mrb[0].mxu0 %v839
        %v990 = vpop.f32.mrb[0].mxu0
        %v991 = vadd.f32 0.0, %v990
        %v992 = vpop.f32.mrb[0].mxu0
        %v993 = vadd.f32 0.0, %v992
        %v994 = vpop.f32.mrb[0].mxu0
        %v995 = vadd.f32 0.0, %v994
        %v996 = vpop.f32.mrb[0].mxu0
        %v997 = vadd.f32 0.0, %v996
        %998 = vmatprep.mubr.bf16.mxu0 0
        %999 = vmatmul.mubr.bf16.gmra.mrb[0].mxu0 %v842
        %v1000 = vpop.f32.mrb[0].mxu0
        %v1001 = vadd.f32 0.0, %v1000
        %v1002 = vpop.f32.mrb[0].mxu0
        %v1003 = vadd.f32 0.0, %v1002
        %v1004 = vpop.f32.mrb[0].mxu0
        %v1005 = vadd.f32 0.0, %v1004
        %v1006 = vpop.f32.mrb[0].mxu0
        %v1007 = vadd.f32 0.0, %v1006
        %1008 = vmatprep.mubr.bf16.mxu0 0
        %1009 = vmatmul.mubr.bf16.gmra.mrb[0].mxu0 %v845
        %v1010 = vpop.f32.mrb[0].mxu0
        %v1011 = vadd.f32 0.0, %v1010
        %v1012 = vpop.f32.mrb[0].mxu0
        %v1013 = vadd.f32 0.0, %v1012
        %v1014 = vpop.f32.mrb[0].mxu0
        %v1015 = vadd.f32 0.0, %v1014
        %v1016 = vpop.f32.mrb[0].mxu0
        %v1017 = vadd.f32 0.0, %v1016
        %1018 = vmatprep.mubr.bf16.mxu0 0
        %1019 = vmatmul.mubr.bf16.gmra.mrb[0].mxu0 %v848
        %v1020 = vpop.f32.mrb[0].mxu0
        %v1021 = vadd.f32 0.0, %v1020
        %v1022 = vpop.f32.mrb[0].mxu0
        %v1023 = vadd.f32 0.0, %v1022
        %v1024 = vpop.f32.mrb[0].mxu0
        %v1025 = vadd.f32 0.0, %v1024
        %v1026 = vpop.f32.mrb[0].mxu0
        %v1027 = vadd.f32 0.0, %v1026
        %1028 = vmatprep.mubr.bf16.mxu0 0
        %1029 = vmatmul.mubr.bf16.gmra.mrb[0].mxu0 %v851
        %v1030 = vpop.f32.mrb[0].mxu0
        %v1031 = vadd.f32 0.0, %v1030
        %v1032 = vpop.f32.mrb[0].mxu0
        %v1033 = vadd.f32 0.0, %v1032
        %v1034 = vpop.f32.mrb[0].mxu0
        %v1035 = vadd.f32 0.0, %v1034
        %v1036 = vpop.f32.mrb[0].mxu0
        %v1037 = vadd.f32 0.0, %v1036
        %1038 = vmatprep.mubr.bf16.mxu0 0
        %1039 = vmatmul.mubr.bf16.gmra.mrb[0].mxu0 %v854
        %v1040 = vpop.f32.mrb[0].mxu0
        %v1041 = vadd.f32 0.0, %v1040
        %v1042 = vpop.f32.mrb[0].mxu0
        %v1043 = vadd.f32 0.0, %v1042
        %v1044 = vpop.f32.mrb[0].mxu0
        %v1045 = vadd.f32 0.0, %v1044
        %v1046 = vpop.f32.mrb[0].mxu0
        %v1047 = vadd.f32 0.0, %v1046
        %1048 = vdwg.mxu0
        %v1049 = vmax.f32 %v891, %v893
        %1050 = vmax.xlane.f32.xlu0 %v1049
        %v1051 = vpop.xlane.xlu0 %1050
        %v1052 = vmax.f32 %v895, %v897
        %1053 = vmax.xlane.f32.xlu0 %v1052
        %v1054 = vpop.xlane.xlu0 %1053
        %v1055 = vmax.f32 %v901, %v903
        %1056 = vmax.xlane.f32.xlu0 %v1055
        %v1057 = vpop.xlane.xlu0 %1056
        %v1058 = vmax.f32 %v905, %v907
        %1059 = vmax.xlane.f32.xlu0 %v1058
        %v1060 = vpop.xlane.xlu0 %1059
        %v1061 = vmax.f32 %v911, %v913
        %1062 = vmax.xlane.f32.xlu0 %v1061
        %v1063 = vpop.xlane.xlu0 %1062
        %v1064 = vmax.f32 %v915, %v917
        %1065 = vmax.xlane.f32.xlu0 %v1064
        %v1066 = vpop.xlane.xlu0 %1065
        %v1067 = vmax.f32 %v921, %v923
        %1068 = vmax.xlane.f32.xlu0 %v1067
        %v1069 = vpop.xlane.xlu0 %1068
        %v1070 = vmax.f32 %v925, %v927
        %1071 = vmax.xlane.f32.xlu0 %v1070
        %v1072 = vpop.xlane.xlu0 %1071
        %v1073 = vmax.f32 %v931, %v933
        %1074 = vmax.xlane.f32.xlu0 %v1073
        %v1075 = vpop.xlane.xlu0 %1074
        %v1076 = vmax.f32 %v935, %v937
        %1077 = vmax.xlane.f32.xlu0 %v1076
        %v1078 = vpop.xlane.xlu0 %1077
        %v1079 = vmax.f32 %v941, %v943
        %1080 = vmax.xlane.f32.xlu0 %v1079
        %v1081 = vpop.xlane.xlu0 %1080
        %v1082 = vmax.f32 %v945, %v947
        %1083 = vmax.xlane.f32.xlu0 %v1082
        %v1084 = vpop.xlane.xlu0 %1083
        %v1085 = vmax.f32 %v951, %v953
        %1086 = vmax.xlane.f32.xlu0 %v1085
        %v1087 = vpop.xlane.xlu0 %1086
        %v1088 = vmax.f32 %v955, %v957
        %1089 = vmax.xlane.f32.xlu0 %v1088
        %v1090 = vpop.xlane.xlu0 %1089
        %v1091 = vmax.f32 %v961, %v963
        %1092 = vmax.xlane.f32.xlu0 %v1091
        %v1093 = vpop.xlane.xlu0 %1092
        %v1094 = vmax.f32 %v965, %v967
        %1095 = vmax.xlane.f32.xlu0 %v1094
        %v1096 = vpop.xlane.xlu0 %1095
        %v1097 = vmax.f32 %v971, %v973
        %1098 = vmax.xlane.f32.xlu0 %v1097
        %v1099 = vpop.xlane.xlu0 %1098
        %v1100 = vmax.f32 %v975, %v977
        %1101 = vmax.xlane.f32.xlu0 %v1100
        %v1102 = vpop.xlane.xlu0 %1101
        %v1103 = vmax.f32 %v981, %v983
        %1104 = vmax.xlane.f32.xlu0 %v1103
        %v1105 = vpop.xlane.xlu0 %1104
        %v1106 = vmax.f32 %v985, %v987
        %1107 = vmax.xlane.f32.xlu0 %v1106
        %v1108 = vpop.xlane.xlu0 %1107
        %v1109 = vmax.f32 %v991, %v993
        %1110 = vmax.xlane.f32.xlu0 %v1109
        %v1111 = vpop.xlane.xlu0 %1110
        %v1112 = vmax.f32 %v995, %v997
        %1113 = vmax.xlane.f32.xlu0 %v1112
        %v1114 = vpop.xlane.xlu0 %1113
        %v1115 = vmax.f32 %v1001, %v1003
        %1116 = vmax.xlane.f32.xlu0 %v1115
        %v1117 = vpop.xlane.xlu0 %1116
        %v1118 = vmax.f32 %v1005, %v1007
        %1119 = vmax.xlane.f32.xlu0 %v1118
        %v1120 = vpop.xlane.xlu0 %1119
        %v1121 = vmax.f32 %v1011, %v1013
        %1122 = vmax.xlane.f32.xlu0 %v1121
        %v1123 = vpop.xlane.xlu0 %1122
        %v1124 = vmax.f32 %v1015, %v1017
        %1125 = vmax.xlane.f32.xlu0 %v1124
        %v1126 = vpop.xlane.xlu0 %1125
        %v1127 = vmax.f32 %v1021, %v1023
        %1128 = vmax.xlane.f32.xlu0 %v1127
        %v1129 = vpop.xlane.xlu0 %1128
        %v1130 = vmax.f32 %v1025, %v1027
        %1131 = vmax.xlane.f32.xlu0 %v1130
        %v1132 = vpop.xlane.xlu0 %1131
        %v1133 = vmax.f32 %v1031, %v1033
        %1134 = vmax.xlane.f32.xlu0 %v1133
        %v1135 = vpop.xlane.xlu0 %1134
        %v1136 = vmax.f32 %v1035, %v1037
        %1137 = vmax.xlane.f32.xlu0 %v1136
        %v1138 = vpop.xlane.xlu0 %1137
        %v1139 = vmax.f32 %v1041, %v1043
        %1140 = vmax.xlane.f32.xlu0 %v1139
        %v1141 = vpop.xlane.xlu0 %1140
        %v1142 = vmax.f32 %v1045, %v1047
        %1143 = vmax.xlane.f32.xlu0 %v1142
        %v1144 = vpop.xlane.xlu0 %1143
        %v1145 = vsub.f32 %v891, %v1051
        %v1146 = vsub.f32 %v893, %v1051
        %v1147 = vsub.f32 %v895, %v1054
        %v1148 = vsub.f32 %v897, %v1054
        %v1149 = vsub.f32 %v901, %v1057
        %v1150 = vsub.f32 %v903, %v1057
        %v1151 = vsub.f32 %v905, %v1060
        %v1152 = vsub.f32 %v907, %v1060
        %v1153 = vsub.f32 %v911, %v1063
        %v1154 = vsub.f32 %v913, %v1063
        %v1155 = vsub.f32 %v915, %v1066
        %v1156 = vsub.f32 %v917, %v1066
        %v1157 = vsub.f32 %v921, %v1069
        %v1158 = vsub.f32 %v923, %v1069
        %v1159 = vsub.f32 %v925, %v1072
        %v1160 = vsub.f32 %v927, %v1072
        %v1161 = vsub.f32 %v931, %v1075
        %v1162 = vsub.f32 %v933, %v1075
        %v1163 = vsub.f32 %v935, %v1078
        %v1164 = vsub.f32 %v937, %v1078
        %v1165 = vsub.f32 %v941, %v1081
        %v1166 = vsub.f32 %v943, %v1081
        %v1167 = vsub.f32 %v945, %v1084
        %v1168 = vsub.f32 %v947, %v1084
        %v1169 = vsub.f32 %v951, %v1087
        %v1170 = vsub.f32 %v953, %v1087
        %v1171 = vsub.f32 %v955, %v1090
        %v1172 = vsub.f32 %v957, %v1090
        %v1173 = vsub.f32 %v961, %v1093
        %v1174 = vsub.f32 %v963, %v1093
        %v1175 = vsub.f32 %v965, %v1096
        %v1176 = vsub.f32 %v967, %v1096
        %v1177 = vsub.f32 %v971, %v1099
        %v1178 = vsub.f32 %v973, %v1099
        %v1179 = vsub.f32 %v975, %v1102
        %v1180 = vsub.f32 %v977, %v1102
        %v1181 = vsub.f32 %v981, %v1105
        %v1182 = vsub.f32 %v983, %v1105
        %v1183 = vsub.f32 %v985, %v1108
        %v1184 = vsub.f32 %v987, %v1108
        %v1185 = vsub.f32 %v991, %v1111
        %v1186 = vsub.f32 %v993, %v1111
        %v1187 = vsub.f32 %v995, %v1114
        %v1188 = vsub.f32 %v997, %v1114
        %v1189 = vsub.f32 %v1001, %v1117
        %v1190 = vsub.f32 %v1003, %v1117
        %v1191 = vsub.f32 %v1005, %v1120
        %v1192 = vsub.f32 %v1007, %v1120
        %v1193 = vsub.f32 %v1011, %v1123
        %v1194 = vsub.f32 %v1013, %v1123
        %v1195 = vsub.f32 %v1015, %v1126
        %v1196 = vsub.f32 %v1017, %v1126
        %v1197 = vsub.f32 %v1021, %v1129
        %v1198 = vsub.f32 %v1023, %v1129
        %v1199 = vsub.f32 %v1025, %v1132
        %v1200 = vsub.f32 %v1027, %v1132
        %v1201 = vsub.f32 %v1031, %v1135
        %v1202 = vsub.f32 %v1033, %v1135
        %v1203 = vsub.f32 %v1035, %v1138
        %v1204 = vsub.f32 %v1037, %v1138
        %v1205 = vsub.f32 %v1041, %v1141
        %v1206 = vsub.f32 %v1043, %v1141
        %v1207 = vsub.f32 %v1045, %v1144
        %v1208 = vsub.f32 %v1047, %v1144
        %v1209 = vmul.f32 %v1145, 1.442695
        %v1210 = vpow.pop %v1209
        %v1211 = vmul.f32 %v1146, 1.442695
        %v1212 = vpow.pop %v1211
        %v1213 = vmul.f32 %v1147, 1.442695
        %v1214 = vpow.pop %v1213
        %v1215 = vmul.f32 %v1148, 1.442695
        %v1216 = vpow.pop %v1215
        %v1217 = vmul.f32 %v1149, 1.442695
        %v1218 = vpow.pop %v1217
        %v1219 = vmul.f32 %v1150, 1.442695
        %v1220 = vpow.pop %v1219
        %v1221 = vmul.f32 %v1151, 1.442695
        %v1222 = vpow.pop %v1221
        %v1223 = vmul.f32 %v1152, 1.442695
        %v1224 = vpow.pop %v1223
        %v1225 = vmul.f32 %v1153, 1.442695
        %v1226 = vpow.pop %v1225
        %v1227 = vmul.f32 %v1154, 1.442695
        %v1228 = vpow.pop %v1227
        %v1229 = vmul.f32 %v1155, 1.442695
        %v1230 = vpow.pop %v1229
        %v1231 = vmul.f32 %v1156, 1.442695
        %v1232 = vpow.pop %v1231
        %v1233 = vmul.f32 %v1157, 1.442695
        %v1234 = vpow.pop %v1233
        %v1235 = vmul.f32 %v1158, 1.442695
        %v1236 = vpow.pop %v1235
        %v1237 = vmul.f32 %v1159, 1.442695
        %v1238 = vpow.pop %v1237
        %v1239 = vmul.f32 %v1160, 1.442695
        %v1240 = vpow.pop %v1239
        %v1241 = vmul.f32 %v1161, 1.442695
        %v1242 = vpow.pop %v1241
        %v1243 = vmul.f32 %v1162, 1.442695
        %v1244 = vpow.pop %v1243
        %v1245 = vmul.f32 %v1163, 1.442695
        %v1246 = vpow.pop %v1245
        %v1247 = vmul.f32 %v1164, 1.442695
        %v1248 = vpow.pop %v1247
        %v1249 = vmul.f32 %v1165, 1.442695
        %v1250 = vpow.pop %v1249
        %v1251 = vmul.f32 %v1166, 1.442695
        %v1252 = vpow.pop %v1251
        %v1253 = vmul.f32 %v1167, 1.442695
        %v1254 = vpow.pop %v1253
        %v1255 = vmul.f32 %v1168, 1.442695
        %v1256 = vpow.pop %v1255
        %v1257 = vmul.f32 %v1169, 1.442695
        %v1258 = vpow.pop %v1257
        %v1259 = vmul.f32 %v1170, 1.442695
        %v1260 = vpow.pop %v1259
        %v1261 = vmul.f32 %v1171, 1.442695
        %v1262 = vpow.pop %v1261
        %v1263 = vmul.f32 %v1172, 1.442695
        %v1264 = vpow.pop %v1263
        %v1265 = vmul.f32 %v1173, 1.442695
        %v1266 = vpow.pop %v1265
        %v1267 = vmul.f32 %v1174, 1.442695
        %v1268 = vpow.pop %v1267
        %v1269 = vmul.f32 %v1175, 1.442695
        %v1270 = vpow.pop %v1269
        %v1271 = vmul.f32 %v1176, 1.442695
        %v1272 = vpow.pop %v1271
        %v1273 = vmul.f32 %v1177, 1.442695
        %v1274 = vpow.pop %v1273
        %v1275 = vmul.f32 %v1178, 1.442695
        %v1276 = vpow.pop %v1275
        %v1277 = vmul.f32 %v1179, 1.442695
        %v1278 = vpow.pop %v1277
        %v1279 = vmul.f32 %v1180, 1.442695
        %v1280 = vpow.pop %v1279
        %v1281 = vmul.f32 %v1181, 1.442695
        %v1282 = vpow.pop %v1281
        %v1283 = vmul.f32 %v1182, 1.442695
        %v1284 = vpow.pop %v1283
        %v1285 = vmul.f32 %v1183, 1.442695
        %v1286 = vpow.pop %v1285
        %v1287 = vmul.f32 %v1184, 1.442695
        %v1288 = vpow.pop %v1287
        %v1289 = vmul.f32 %v1185, 1.442695
        %v1290 = vpow.pop %v1289
        %v1291 = vmul.f32 %v1186, 1.442695
        %v1292 = vpow.pop %v1291
        %v1293 = vmul.f32 %v1187, 1.442695
        %v1294 = vpow.pop %v1293
        %v1295 = vmul.f32 %v1188, 1.442695
        %v1296 = vpow.pop %v1295
        %v1297 = vmul.f32 %v1189, 1.442695
        %v1298 = vpow.pop %v1297
        %v1299 = vmul.f32 %v1190, 1.442695
        %v1300 = vpow.pop %v1299
        %v1301 = vmul.f32 %v1191, 1.442695
        %v1302 = vpow.pop %v1301
        %v1303 = vmul.f32 %v1192, 1.442695
        %v1304 = vpow.pop %v1303
        %v1305 = vmul.f32 %v1193, 1.442695
        %v1306 = vpow.pop %v1305
        %v1307 = vmul.f32 %v1194, 1.442695
        %v1308 = vpow.pop %v1307
        %v1309 = vmul.f32 %v1195, 1.442695
        %v1310 = vpow.pop %v1309
        %v1311 = vmul.f32 %v1196, 1.442695
        %v1312 = vpow.pop %v1311
        %v1313 = vmul.f32 %v1197, 1.442695
        %v1314 = vpow.pop %v1313
        %v1315 = vmul.f32 %v1198, 1.442695
        %v1316 = vpow.pop %v1315
        %v1317 = vmul.f32 %v1199, 1.442695
        %v1318 = vpow.pop %v1317
        %v1319 = vmul.f32 %v1200, 1.442695
        %v1320 = vpow.pop %v1319
        %v1321 = vmul.f32 %v1201, 1.442695
        %v1322 = vpow.pop %v1321
        %v1323 = vmul.f32 %v1202, 1.442695
        %v1324 = vpow.pop %v1323
        %v1325 = vmul.f32 %v1203, 1.442695
        %v1326 = vpow.pop %v1325
        %v1327 = vmul.f32 %v1204, 1.442695
        %v1328 = vpow.pop %v1327
        %v1329 = vmul.f32 %v1205, 1.442695
        %v1330 = vpow.pop %v1329
        %v1331 = vmul.f32 %v1206, 1.442695
        %v1332 = vpow.pop %v1331
        %v1333 = vmul.f32 %v1207, 1.442695
        %v1334 = vpow.pop %v1333
        %v1335 = vmul.f32 %v1208, 1.442695
        %v1336 = vpow.pop %v1335
        %v1337 = vadd.f32 %v1210, %v1212
        %1338 = vadd.xlane.f32.xlu0 %v1337
        %v1339 = vpop.xlane.xlu0 %1338
        %v1340 = vadd.f32 %v1214, %v1216
        %1341 = vadd.xlane.f32.xlu0 %v1340
        %v1342 = vpop.xlane.xlu0 %1341
        %v1343 = vadd.f32 %v1218, %v1220
        %1344 = vadd.xlane.f32.xlu0 %v1343
        %v1345 = vpop.xlane.xlu0 %1344
        %v1346 = vadd.f32 %v1222, %v1224
        %1347 = vadd.xlane.f32.xlu0 %v1346
        %v1348 = vpop.xlane.xlu0 %1347
        %v1349 = vadd.f32 %v1226, %v1228
        %1350 = vadd.xlane.f32.xlu0 %v1349
        %v1351 = vpop.xlane.xlu0 %1350
        %v1352 = vadd.f32 %v1230, %v1232
        %1353 = vadd.xlane.f32.xlu0 %v1352
        %v1354 = vpop.xlane.xlu0 %1353
        %v1355 = vadd.f32 %v1234, %v1236
        %1356 = vadd.xlane.f32.xlu0 %v1355
        %v1357 = vpop.xlane.xlu0 %1356
        %v1358 = vadd.f32 %v1238, %v1240
        %1359 = vadd.xlane.f32.xlu0 %v1358
        %v1360 = vpop.xlane.xlu0 %1359
        %v1361 = vadd.f32 %v1242, %v1244
        %1362 = vadd.xlane.f32.xlu0 %v1361
        %v1363 = vpop.xlane.xlu0 %1362
        %v1364 = vadd.f32 %v1246, %v1248
        %1365 = vadd.xlane.f32.xlu0 %v1364
        %v1366 = vpop.xlane.xlu0 %1365
        %v1367 = vadd.f32 %v1250, %v1252
        %1368 = vadd.xlane.f32.xlu0 %v1367
        %v1369 = vpop.xlane.xlu0 %1368
        %v1370 = vadd.f32 %v1254, %v1256
        %1371 = vadd.xlane.f32.xlu0 %v1370
        %v1372 = vpop.xlane.xlu0 %1371
        %v1373 = vadd.f32 %v1258, %v1260
        %1374 = vadd.xlane.f32.xlu0 %v1373
        %v1375 = vpop.xlane.xlu0 %1374
        %v1376 = vadd.f32 %v1262, %v1264
        %1377 = vadd.xlane.f32.xlu0 %v1376
        %v1378 = vpop.xlane.xlu0 %1377
        %v1379 = vadd.f32 %v1266, %v1268
        %1380 = vadd.xlane.f32.xlu0 %v1379
        %v1381 = vpop.xlane.xlu0 %1380
        %v1382 = vadd.f32 %v1270, %v1272
        %1383 = vadd.xlane.f32.xlu0 %v1382
        %v1384 = vpop.xlane.xlu0 %1383
        %v1385 = vadd.f32 %v1274, %v1276
        %1386 = vadd.xlane.f32.xlu0 %v1385
        %v1387 = vpop.xlane.xlu0 %1386
        %v1388 = vadd.f32 %v1278, %v1280
        %1389 = vadd.xlane.f32.xlu0 %v1388
        %v1390 = vpop.xlane.xlu0 %1389
        %v1391 = vadd.f32 %v1282, %v1284
        %1392 = vadd.xlane.f32.xlu0 %v1391
        %v1393 = vpop.xlane.xlu0 %1392
        %v1394 = vadd.f32 %v1286, %v1288
        %1395 = vadd.xlane.f32.xlu0 %v1394
        %v1396 = vpop.xlane.xlu0 %1395
        %v1397 = vadd.f32 %v1290, %v1292
        %1398 = vadd.xlane.f32.xlu0 %v1397
        %v1399 = vpop.xlane.xlu0 %1398
        %v1400 = vadd.f32 %v1294, %v1296
        %1401 = vadd.xlane.f32.xlu0 %v1400
        %v1402 = vpop.xlane.xlu0 %1401
        %v1403 = vadd.f32 %v1298, %v1300
        %1404 = vadd.xlane.f32.xlu0 %v1403
        %v1405 = vpop.xlane.xlu0 %1404
        %v1406 = vadd.f32 %v1302, %v1304
        %1407 = vadd.xlane.f32.xlu0 %v1406
        %v1408 = vpop.xlane.xlu0 %1407
        %v1409 = vadd.f32 %v1306, %v1308
        %1410 = vadd.xlane.f32.xlu0 %v1409
        %v1411 = vpop.xlane.xlu0 %1410
        %v1412 = vadd.f32 %v1310, %v1312
        %1413 = vadd.xlane.f32.xlu0 %v1412
        %v1414 = vpop.xlane.xlu0 %1413
        %v1415 = vadd.f32 %v1314, %v1316
        %1416 = vadd.xlane.f32.xlu0 %v1415
        %v1417 = vpop.xlane.xlu0 %1416
        %v1418 = vadd.f32 %v1318, %v1320
        %1419 = vadd.xlane.f32.xlu0 %v1418
        %v1420 = vpop.xlane.xlu0 %1419
        %v1421 = vadd.f32 %v1322, %v1324
        %1422 = vadd.xlane.f32.xlu0 %v1421
        %v1423 = vpop.xlane.xlu0 %1422
        %v1424 = vadd.f32 %v1326, %v1328
        %1425 = vadd.xlane.f32.xlu0 %v1424
        %v1426 = vpop.xlane.xlu0 %1425
        %v1427 = vadd.f32 %v1330, %v1332
        %1428 = vadd.xlane.f32.xlu0 %v1427
        %v1429 = vpop.xlane.xlu0 %1428
        %v1430 = vadd.f32 %v1334, %v1336
        %1431 = vadd.xlane.f32.xlu0 %v1430
        %v1432 = vpop.xlane.xlu0 %1431
        %v1433 = vrcp.pop %v1339
        %v1434 = vrcp.pop %v1342
        %v1435 = vrcp.pop %v1345
        %v1436 = vrcp.pop %v1348
        %v1437 = vrcp.pop %v1351
        %v1438 = vrcp.pop %v1354
        %v1439 = vrcp.pop %v1357
        %v1440 = vrcp.pop %v1360
        %v1441 = vrcp.pop %v1363
        %v1442 = vrcp.pop %v1366
        %v1443 = vrcp.pop %v1369
        %v1444 = vrcp.pop %v1372
        %v1445 = vrcp.pop %v1375
        %v1446 = vrcp.pop %v1378
        %v1447 = vrcp.pop %v1381
        %v1448 = vrcp.pop %v1384
        %v1449 = vrcp.pop %v1387
        %v1450 = vrcp.pop %v1390
        %v1451 = vrcp.pop %v1393
        %v1452 = vrcp.pop %v1396
        %v1453 = vrcp.pop %v1399
        %v1454 = vrcp.pop %v1402
        %v1455 = vrcp.pop %v1405
        %v1456 = vrcp.pop %v1408
        %v1457 = vrcp.pop %v1411
        %v1458 = vrcp.pop %v1414
        %v1459 = vrcp.pop %v1417
        %v1460 = vrcp.pop %v1420
        %v1461 = vrcp.pop %v1423
        %v1462 = vrcp.pop %v1426
        %v1463 = vrcp.pop %v1429
        %v1464 = vrcp.pop %v1432
        %v1465 = vmul.f32 %v1210, %v1433
        %v1466 = vmul.f32 %v1212, %v1433
        %v1467 = vmul.f32 %v1214, %v1434
        %v1468 = vmul.f32 %v1216, %v1434
        %v1469 = vmul.f32 %v1218, %v1435
        %v1470 = vmul.f32 %v1220, %v1435
        %v1471 = vmul.f32 %v1222, %v1436
        %v1472 = vmul.f32 %v1224, %v1436
        %v1473 = vmul.f32 %v1226, %v1437
        %v1474 = vmul.f32 %v1228, %v1437
        %v1475 = vmul.f32 %v1230, %v1438
        %v1476 = vmul.f32 %v1232, %v1438
        %v1477 = vmul.f32 %v1234, %v1439
        %v1478 = vmul.f32 %v1236, %v1439
        %v1479 = vmul.f32 %v1238, %v1440
        %v1480 = vmul.f32 %v1240, %v1440
        %v1481 = vmul.f32 %v1242, %v1441
        %v1482 = vmul.f32 %v1244, %v1441
        %v1483 = vmul.f32 %v1246, %v1442
        %v1484 = vmul.f32 %v1248, %v1442
        %v1485 = vmul.f32 %v1250, %v1443
        %v1486 = vmul.f32 %v1252, %v1443
        %v1487 = vmul.f32 %v1254, %v1444
        %v1488 = vmul.f32 %v1256, %v1444
        %v1489 = vmul.f32 %v1258, %v1445
        %v1490 = vmul.f32 %v1260, %v1445
        %v1491 = vmul.f32 %v1262, %v1446
        %v1492 = vmul.f32 %v1264, %v1446
        %v1493 = vmul.f32 %v1266, %v1447
        %v1494 = vmul.f32 %v1268, %v1447
        %v1495 = vmul.f32 %v1270, %v1448
        %v1496 = vmul.f32 %v1272, %v1448
        %v1497 = vmul.f32 %v1274, %v1449
        %v1498 = vmul.f32 %v1276, %v1449
        %v1499 = vmul.f32 %v1278, %v1450
        %v1500 = vmul.f32 %v1280, %v1450
        %v1501 = vmul.f32 %v1282, %v1451
        %v1502 = vmul.f32 %v1284, %v1451
        %v1503 = vmul.f32 %v1286, %v1452
        %v1504 = vmul.f32 %v1288, %v1452
        %v1505 = vmul.f32 %v1290, %v1453
        %v1506 = vmul.f32 %v1292, %v1453
        %v1507 = vmul.f32 %v1294, %v1454
        %v1508 = vmul.f32 %v1296, %v1454
        %v1509 = vmul.f32 %v1298, %v1455
        %v1510 = vmul.f32 %v1300, %v1455
        %v1511 = vmul.f32 %v1302, %v1456
        %v1512 = vmul.f32 %v1304, %v1456
        %v1513 = vmul.f32 %v1306, %v1457
        %v1514 = vmul.f32 %v1308, %v1457
        %v1515 = vmul.f32 %v1310, %v1458
        %v1516 = vmul.f32 %v1312, %v1458
        %v1517 = vmul.f32 %v1314, %v1459
        %v1518 = vmul.f32 %v1316, %v1459
        %v1519 = vmul.f32 %v1318, %v1460
        %v1520 = vmul.f32 %v1320, %v1460
        %v1521 = vmul.f32 %v1322, %v1461
        %v1522 = vmul.f32 %v1324, %v1461
        %v1523 = vmul.f32 %v1326, %v1462
        %v1524 = vmul.f32 %v1328, %v1462
        %v1525 = vmul.f32 %v1330, %v1463
        %v1526 = vmul.f32 %v1332, %v1463
        %v1527 = vmul.f32 %v1334, %v1464
        %v1528 = vmul.f32 %v1336, %v1464
        %v1529 = vadd.f32 %v1465, %v1467
        %v1530 = vadd.f32 %v1529, %v1469
        %v1531 = vadd.f32 %v1530, %v1471
        %v1532 = vadd.f32 %v1531, %v1473
        %v1533 = vadd.f32 %v1532, %v1475
        %v1534 = vadd.f32 %v1533, %v1477
        %v1535 = vadd.f32 %v1534, %v1479
        %v1536 = vadd.f32 %v1535, %v1481
        %v1537 = vadd.f32 %v1536, %v1483
        %v1538 = vadd.f32 %v1537, %v1485
        %v1539 = vadd.f32 %v1538, %v1487
        %v1540 = vadd.f32 %v1539, %v1489
        %v1541 = vadd.f32 %v1540, %v1491
        %v1542 = vadd.f32 %v1541, %v1493
        %v1543 = vadd.f32 %v1542, %v1495
        %v1544 = vadd.f32 %v1543, %v1497
        %v1545 = vadd.f32 %v1544, %v1499
        %v1546 = vadd.f32 %v1545, %v1501
        %v1547 = vadd.f32 %v1546, %v1503
        %v1548 = vadd.f32 %v1547, %v1505
        %v1549 = vadd.f32 %v1548, %v1507
        %v1550 = vadd.f32 %v1549, %v1509
        %v1551 = vadd.f32 %v1550, %v1511
        %v1552 = vadd.f32 %v1551, %v1513
        %v1553 = vadd.f32 %v1552, %v1515
        %v1554 = vadd.f32 %v1553, %v1517
        %v1555 = vadd.f32 %v1554, %v1519
        %v1556 = vadd.f32 %v1555, %v1521
        %v1557 = vadd.f32 %v1556, %v1523
        %v1558 = vadd.f32 %v1557, %v1525
        %v1559 = vadd.f32 %v1558, %v1527
        %v1560 = vrot.slane %v1559, 4
        %v1561 = vadd.f32 %v1559, %v1560
        %v1562 = vrot.slane %v1561, 2
        %v1563 = vadd.f32 %v1561, %v1562
        %v1564 = vrot.slane %v1563, 1
        %v1565 = vadd.f32 %v1563, %v1564
        %v1566 = vadd.f32 %v1466, %v1468
        %v1567 = vadd.f32 %v1566, %v1470
        %v1568 = vadd.f32 %v1567, %v1472
        %v1569 = vadd.f32 %v1568, %v1474
        %v1570 = vadd.f32 %v1569, %v1476
        %v1571 = vadd.f32 %v1570, %v1478
        %v1572 = vadd.f32 %v1571, %v1480
        %v1573 = vadd.f32 %v1572, %v1482
        %v1574 = vadd.f32 %v1573, %v1484
        %v1575 = vadd.f32 %v1574, %v1486
        %v1576 = vadd.f32 %v1575, %v1488
        %v1577 = vadd.f32 %v1576, %v1490
        %v1578 = vadd.f32 %v1577, %v1492
        %v1579 = vadd.f32 %v1578, %v1494
        %v1580 = vadd.f32 %v1579, %v1496
        %v1581 = vadd.f32 %v1580, %v1498
        %v1582 = vadd.f32 %v1581, %v1500
        %v1583 = vadd.f32 %v1582, %v1502
        %v1584 = vadd.f32 %v1583, %v1504
        %v1585 = vadd.f32 %v1584, %v1506
        %v1586 = vadd.f32 %v1585, %v1508
        %v1587 = vadd.f32 %v1586, %v1510
        %v1588 = vadd.f32 %v1587, %v1512
        %v1589 = vadd.f32 %v1588, %v1514
        %v1590 = vadd.f32 %v1589, %v1516
        %v1591 = vadd.f32 %v1590, %v1518
        %v1592 = vadd.f32 %v1591, %v1520
        %v1593 = vadd.f32 %v1592, %v1522
        %v1594 = vadd.f32 %v1593, %v1524
        %v1595 = vadd.f32 %v1594, %v1526
        %v1596 = vadd.f32 %v1595, %v1528
        %v1597 = vrot.slane %v1596, 4
        %v1598 = vadd.f32 %v1596, %v1597
        %v1599 = vrot.slane %v1598, 2
        %v1600 = vadd.f32 %v1598, %v1599
        %v1601 = vrot.slane %v1600, 1
        %v1602 = vadd.f32 %v1600, %v1601
        %v1603 = vadd.f32 %v1565, 1e-09
        %v1604 = vadd.f32 %v1602, 1e-09
        %v1605 = vrcp.pop %v1603
        %v1606 = vrcp.pop %v1604
        %v1607 = vmul.f32 %v1465, %v1605
        %v1608 = vmul.f32 %v1466, %v1606
        %v1609 = vmul.f32 %v1467, %v1605
        %v1610 = vmul.f32 %v1468, %v1606
        %v1611 = vmul.f32 %v1469, %v1605
        %v1612 = vmul.f32 %v1470, %v1606
        %v1613 = vmul.f32 %v1471, %v1605
        %v1614 = vmul.f32 %v1472, %v1606
        %v1615 = vmul.f32 %v1473, %v1605
        %v1616 = vmul.f32 %v1474, %v1606
        %v1617 = vmul.f32 %v1475, %v1605
        %v1618 = vmul.f32 %v1476, %v1606
        %v1619 = vmul.f32 %v1477, %v1605
        %v1620 = vmul.f32 %v1478, %v1606
        %v1621 = vmul.f32 %v1479, %v1605
        %v1622 = vmul.f32 %v1480, %v1606
        %v1623 = vmul.f32 %v1481, %v1605
        %v1624 = vmul.f32 %v1482, %v1606
        %v1625 = vmul.f32 %v1483, %v1605
        %v1626 = vmul.f32 %v1484, %v1606
        %v1627 = vmul.f32 %v1485, %v1605
        %v1628 = vmul.f32 %v1486, %v1606
        %v1629 = vmul.f32 %v1487, %v1605
        %v1630 = vmul.f32 %v1488, %v1606
        %v1631 = vmul.f32 %v1489, %v1605
        %v1632 = vmul.f32 %v1490, %v1606
        %v1633 = vmul.f32 %v1491, %v1605
        %v1634 = vmul.f32 %v1492, %v1606
        %v1635 = vmul.f32 %v1493, %v1605
        %v1636 = vmul.f32 %v1494, %v1606
        %v1637 = vmul.f32 %v1495, %v1605
        %v1638 = vmul.f32 %v1496, %v1606
        %v1639 = vmul.f32 %v1497, %v1605
        %v1640 = vmul.f32 %v1498, %v1606
        %v1641 = vmul.f32 %v1499, %v1605
        %v1642 = vmul.f32 %v1500, %v1606
        %v1643 = vmul.f32 %v1501, %v1605
        %v1644 = vmul.f32 %v1502, %v1606
        %v1645 = vmul.f32 %v1503, %v1605
        %v1646 = vmul.f32 %v1504, %v1606
        %v1647 = vmul.f32 %v1505, %v1605
        %v1648 = vmul.f32 %v1506, %v1606
        %v1649 = vmul.f32 %v1507, %v1605
        %v1650 = vmul.f32 %v1508, %v1606
        %v1651 = vmul.f32 %v1509, %v1605
        %v1652 = vmul.f32 %v1510, %v1606
        %v1653 = vmul.f32 %v1511, %v1605
        %v1654 = vmul.f32 %v1512, %v1606
        %v1655 = vmul.f32 %v1513, %v1605
        %v1656 = vmul.f32 %v1514, %v1606
        %v1657 = vmul.f32 %v1515, %v1605
        %v1658 = vmul.f32 %v1516, %v1606
        %v1659 = vmul.f32 %v1517, %v1605
        %v1660 = vmul.f32 %v1518, %v1606
        %v1661 = vmul.f32 %v1519, %v1605
        %v1662 = vmul.f32 %v1520, %v1606
        %v1663 = vmul.f32 %v1521, %v1605
        %v1664 = vmul.f32 %v1522, %v1606
        %v1665 = vmul.f32 %v1523, %v1605
        %v1666 = vmul.f32 %v1524, %v1606
        %v1667 = vmul.f32 %v1525, %v1605
        %v1668 = vmul.f32 %v1526, %v1606
        %v1669 = vmul.f32 %v1527, %v1605
        %v1670 = vmul.f32 %v1528, %v1606
        %v1671 = vpack.c.bf16 %v1609, %v1607
        %v1672 = vpack.c.bf16 %v1610, %v1608
        %v1673 = vpack.c.bf16 %v1613, %v1611
        %v1674 = vpack.c.bf16 %v1614, %v1612
        %v1675 = vpack.c.bf16 %v1617, %v1615
        %v1676 = vpack.c.bf16 %v1618, %v1616
        %v1677 = vpack.c.bf16 %v1621, %v1619
        %v1678 = vpack.c.bf16 %v1622, %v1620
        %v1679 = vpack.c.bf16 %v1625, %v1623
        %v1680 = vpack.c.bf16 %v1626, %v1624
        %v1681 = vpack.c.bf16 %v1629, %v1627
        %v1682 = vpack.c.bf16 %v1630, %v1628
        %v1683 = vpack.c.bf16 %v1633, %v1631
        %v1684 = vpack.c.bf16 %v1634, %v1632
        %v1685 = vpack.c.bf16 %v1637, %v1635
        %v1686 = vpack.c.bf16 %v1638, %v1636
        %v1687 = vpack.c.bf16 %v1641, %v1639
        %v1688 = vpack.c.bf16 %v1642, %v1640
        %v1689 = vpack.c.bf16 %v1645, %v1643
        %v1690 = vpack.c.bf16 %v1646, %v1644
        %v1691 = vpack.c.bf16 %v1649, %v1647
        %v1692 = vpack.c.bf16 %v1650, %v1648
        %v1693 = vpack.c.bf16 %v1653, %v1651
        %v1694 = vpack.c.bf16 %v1654, %v1652
        %v1695 = vpack.c.bf16 %v1657, %v1655
        %v1696 = vpack.c.bf16 %v1658, %v1656
        %v1697 = vpack.c.bf16 %v1661, %v1659
        %v1698 = vpack.c.bf16 %v1662, %v1660
        %v1699 = vpack.c.bf16 %v1665, %v1663
        %v1700 = vpack.c.bf16 %v1666, %v1664
        %v1701 = vpack.c.bf16 %v1669, %v1667
        %v1702 = vpack.c.bf16 %v1670, %v1668
        %v1703 = vpack.c.bf16 %v668, %v665
        %v1704 = vpack.c.bf16 %v676, %v673
        %v1705 = vpack.c.bf16 %v684, %v681
        %v1706 = vpack.c.bf16 %v692, %v689
        %v1707 = vpack.c.bf16 %v700, %v697
        %v1708 = vpack.c.bf16 %v708, %v705
        %v1709 = vpack.c.bf16 %v716, %v713
        %v1710 = vpack.c.bf16 %v724, %v721
        %v1711 = vpack.c.bf16 %v732, %v729
        %v1712 = vpack.c.bf16 %v740, %v737
        %v1713 = vpack.c.bf16 %v748, %v745
        %v1714 = vpack.c.bf16 %v756, %v753
        %v1715 = vpack.c.bf16 %v764, %v761
        %v1716 = vpack.c.bf16 %v772, %v769
        %v1717 = vpack.c.bf16 %v780, %v777
        %v1718 = vpack.c.bf16 %v788, %v785
        %1719 = vxpose.xlu0.c.b16.start [1/8] %v1671, 128
        %1720 = vxpose.xlu0.c.b16.cont [2/8] %v1673, 128
        %1721 = vxpose.xlu0.c.b16.cont [3/8] %v1675, 128
        %1722 = vxpose.xlu0.c.b16.cont [4/8] %v1677, 128
        %1723 = vxpose.xlu0.c.b16.cont [5/8] %v1679, 128
        %1724 = vxpose.xlu0.c.b16.cont [6/8] %v1681, 128
        %1725 = vxpose.xlu0.c.b16.cont [7/8] %v1683, 128
        %1726 = vxpose.xlu0.c.b16.end [8/8] %v1685, 128
        %v1727 = vpop.trf.xlu0
        %v1728 = vpop.trf.xlu0
        %v1729 = vpop.trf.xlu0
        %v1730 = vpop.trf.xlu0
        %v1731 = vpop.trf.xlu0
        %v1732 = vpop.trf.xlu0
        %v1733 = vpop.trf.xlu0
        %v1734 = vpop.trf.xlu0
        %1735 = vxpose.xlu0.c.b16.start [1/8] %v1672, 128
        %1736 = vxpose.xlu0.c.b16.cont [2/8] %v1674, 128
        %1737 = vxpose.xlu0.c.b16.cont [3/8] %v1676, 128
        %1738 = vxpose.xlu0.c.b16.cont [4/8] %v1678, 128
        %1739 = vxpose.xlu0.c.b16.cont [5/8] %v1680, 128
        %1740 = vxpose.xlu0.c.b16.cont [6/8] %v1682, 128
        %1741 = vxpose.xlu0.c.b16.cont [7/8] %v1684, 128
        %1742 = vxpose.xlu0.c.b16.end [8/8] %v1686, 128
        %v1743 = vpop.trf.xlu0
        %v1744 = vpop.trf.xlu0
        %v1745 = vpop.trf.xlu0
        %v1746 = vpop.trf.xlu0
        %v1747 = vpop.trf.xlu0
        %v1748 = vpop.trf.xlu0
        %v1749 = vpop.trf.xlu0
        %v1750 = vpop.trf.xlu0
        %1751 = vxpose.xlu0.c.b16.start [1/8] %v1687, 128
        %1752 = vxpose.xlu0.c.b16.cont [2/8] %v1689, 128
        %1753 = vxpose.xlu0.c.b16.cont [3/8] %v1691, 128
        %1754 = vxpose.xlu0.c.b16.cont [4/8] %v1693, 128
        %1755 = vxpose.xlu0.c.b16.cont [5/8] %v1695, 128
        %1756 = vxpose.xlu0.c.b16.cont [6/8] %v1697, 128
        %1757 = vxpose.xlu0.c.b16.cont [7/8] %v1699, 128
        %1758 = vxpose.xlu0.c.b16.end [8/8] %v1701, 128
        %v1759 = vpop.trf.xlu0
        %v1760 = vpop.trf.xlu0
        %v1761 = vpop.trf.xlu0
        %v1762 = vpop.trf.xlu0
        %v1763 = vpop.trf.xlu0
        %v1764 = vpop.trf.xlu0
        %v1765 = vpop.trf.xlu0
        %v1766 = vpop.trf.xlu0
        %1767 = vxpose.xlu0.c.b16.start [1/8] %v1688, 128
        %1768 = vxpose.xlu0.c.b16.cont [2/8] %v1690, 128
        %1769 = vxpose.xlu0.c.b16.cont [3/8] %v1692, 128
        %1770 = vxpose.xlu0.c.b16.cont [4/8] %v1694, 128
        %1771 = vxpose.xlu0.c.b16.cont [5/8] %v1696, 128
        %1772 = vxpose.xlu0.c.b16.cont [6/8] %v1698, 128
        %1773 = vxpose.xlu0.c.b16.cont [7/8] %v1700, 128
        %1774 = vxpose.xlu0.c.b16.end [8/8] %v1702, 128
        %v1775 = vpop.trf.xlu0
        %v1776 = vpop.trf.xlu0
        %v1777 = vpop.trf.xlu0
        %v1778 = vpop.trf.xlu0
        %v1779 = vpop.trf.xlu0
        %v1780 = vpop.trf.xlu0
        %v1781 = vpop.trf.xlu0
        %v1782 = vpop.trf.xlu0
        %1783 = vmatprep.subr.bf16.mxu0 0
        %1784 = vmatpush1.bf16.msra.mxu0 %v1703
        %1785 = vmatprep.subr.bf16.mxu0 0
        %1786 = vmatpush1.bf16.msra.mxu0 %v1704
        %1787 = vmatprep.subr.bf16.mxu0 0
        %1788 = vmatpush1.bf16.msra.mxu0 %v1705
        %1789 = vmatprep.subr.bf16.mxu0 0
        %1790 = vmatpush1.bf16.msra.mxu0 %v1706
        %1791 = vmatprep.subr.bf16.mxu0 0
        %1792 = vmatpush1.bf16.msra.mxu0 %v1707
        %1793 = vmatprep.subr.bf16.mxu0 0
        %1794 = vmatpush1.bf16.msra.mxu0 %v1708
        %1795 = vmatprep.subr.bf16.mxu0 0
        %1796 = vmatpush1.bf16.msra.mxu0 %v1709
        %1797 = vmatprep.subr.bf16.mxu0 0
        %1798 = vmatpush1.bf16.msra.mxu0 %v1710
        %1799 = vmatprep.subr.bf16.mxu0 0
        %1800 = vmatpush1.bf16.msra.mxu0 %v1711
        %1801 = vmatprep.subr.bf16.mxu0 0
        %1802 = vmatpush1.bf16.msra.mxu0 %v1712
        %1803 = vmatprep.subr.bf16.mxu0 0
        %1804 = vmatpush1.bf16.msra.mxu0 %v1713
        %1805 = vmatprep.subr.bf16.mxu0 0
        %1806 = vmatpush1.bf16.msra.mxu0 %v1714
        %1807 = vmatprep.subr.bf16.mxu0 0
        %1808 = vmatpush1.bf16.msra.mxu0 %v1715
        %1809 = vmatprep.subr.bf16.mxu0 0
        %1810 = vmatpush1.bf16.msra.mxu0 %v1716
        %1811 = vmatprep.subr.bf16.mxu0 0
        %1812 = vmatpush1.bf16.msra.mxu0 %v1717
        %1813 = vmatprep.subr.bf16.mxu0 0
        %1814 = vmatpush1.bf16.msra.mxu0 %v1718
        %1815 = vmatprep.mubr.bf16.mxu0 %v1759
        %1816 = vmatmul.mubr.bf16.gmra.mrb[0].mxu0 %v1727
        %v1817 = vpop.f32.mrb[0].mxu0
        %v1818 = vadd.f32 0.0, %v1817
        %v1819 = vpop.f32.mrb[0].mxu0
        %v1820 = vpop.f32.mrb[0].mxu0
        %v1821 = vadd.f32 0.0, %v1820
        %v1822 = vpop.f32.mrb[0].mxu0
        %1823 = vmatprep.mubr.bf16.mxu0 %v1760
        %1824 = vmatmul.mubr.bf16.gmra.mrb[0].mxu0 %v1728
        %v1825 = vpop.f32.mrb[0].mxu0
        %v1826 = vadd.f32 0.0, %v1825
        %v1827 = vpop.f32.mrb[0].mxu0
        %v1828 = vpop.f32.mrb[0].mxu0
        %v1829 = vadd.f32 0.0, %v1828
        %v1830 = vpop.f32.mrb[0].mxu0
        %1831 = vmatprep.mubr.bf16.mxu0 %v1761
        %1832 = vmatmul.mubr.bf16.gmra.mrb[0].mxu0 %v1729
        %v1833 = vpop.f32.mrb[0].mxu0
        %v1834 = vadd.f32 0.0, %v1833
        %v1835 = vpop.f32.mrb[0].mxu0
        %v1836 = vpop.f32.mrb[0].mxu0
        %v1837 = vadd.f32 0.0, %v1836
        %v1838 = vpop.f32.mrb[0].mxu0
        %1839 = vmatprep.mubr.bf16.mxu0 %v1762
        %1840 = vmatmul.mubr.bf16.gmra.mrb[0].mxu0 %v1730
        %v1841 = vpop.f32.mrb[0].mxu0
        %v1842 = vadd.f32 0.0, %v1841
        %v1843 = vpop.f32.mrb[0].mxu0
        %v1844 = vpop.f32.mrb[0].mxu0
        %v1845 = vadd.f32 0.0, %v1844
        %v1846 = vpop.f32.mrb[0].mxu0
        %1847 = vmatprep.mubr.bf16.mxu0 %v1763
        %1848 = vmatmul.mubr.bf16.gmra.mrb[0].mxu0 %v1731
        %v1849 = vpop.f32.mrb[0].mxu0
        %v1850 = vadd.f32 0.0, %v1849
        %v1851 = vpop.f32.mrb[0].mxu0
        %v1852 = vpop.f32.mrb[0].mxu0
        %v1853 = vadd.f32 0.0, %v1852
        %v1854 = vpop.f32.mrb[0].mxu0
        %1855 = vmatprep.mubr.bf16.mxu0 %v1764
        %1856 = vmatmul.mubr.bf16.gmra.mrb[0].mxu0 %v1732
        %v1857 = vpop.f32.mrb[0].mxu0
        %v1858 = vadd.f32 0.0, %v1857
        %v1859 = vpop.f32.mrb[0].mxu0
        %v1860 = vpop.f32.mrb[0].mxu0
        %v1861 = vadd.f32 0.0, %v1860
        %v1862 = vpop.f32.mrb[0].mxu0
        %1863 = vmatprep.mubr.bf16.mxu0 %v1765
        %1864 = vmatmul.mubr.bf16.gmra.mrb[0].mxu0 %v1733
        %v1865 = vpop.f32.mrb[0].mxu0
        %v1866 = vadd.f32 0.0, %v1865
        %v1867 = vpop.f32.mrb[0].mxu0
        %v1868 = vpop.f32.mrb[0].mxu0
        %v1869 = vadd.f32 0.0, %v1868
        %v1870 = vpop.f32.mrb[0].mxu0
        %1871 = vmatprep.mubr.bf16.mxu0 %v1766
        %1872 = vmatmul.mubr.bf16.gmra.mrb[0].mxu0 %v1734
        %v1873 = vpop.f32.mrb[0].mxu0
        %v1874 = vadd.f32 0.0, %v1873
        %v1875 = vpop.f32.mrb[0].mxu0
        %v1876 = vpop.f32.mrb[0].mxu0
        %v1877 = vadd.f32 0.0, %v1876
        %v1878 = vpop.f32.mrb[0].mxu0
        %1879 = vmatprep.mubr.bf16.mxu0 %v1775
        %1880 = vmatmul.mubr.bf16.gmra.mrb[0].mxu0 %v1743
        %v1881 = vpop.f32.mrb[0].mxu0
        %v1882 = vadd.f32 0.0, %v1881
        %v1883 = vpop.f32.mrb[0].mxu0
        %v1884 = vpop.f32.mrb[0].mxu0
        %v1885 = vadd.f32 0.0, %v1884
        %v1886 = vpop.f32.mrb[0].mxu0
        %1887 = vmatprep.mubr.bf16.mxu0 %v1776
        %1888 = vmatmul.mubr.bf16.gmra.mrb[0].mxu0 %v1744
        %v1889 = vpop.f32.mrb[0].mxu0
        %v1890 = vadd.f32 0.0, %v1889
        %v1891 = vpop.f32.mrb[0].mxu0
        %v1892 = vpop.f32.mrb[0].mxu0
        %v1893 = vadd.f32 0.0, %v1892
        %v1894 = vpop.f32.mrb[0].mxu0
        %1895 = vmatprep.mubr.bf16.mxu0 %v1777
        %1896 = vmatmul.mubr.bf16.gmra.mrb[0].mxu0 %v1745
        %v1897 = vpop.f32.mrb[0].mxu0
        %v1898 = vadd.f32 0.0, %v1897
        %v1899 = vpop.f32.mrb[0].mxu0
        %v1900 = vpop.f32.mrb[0].mxu0
        %v1901 = vadd.f32 0.0, %v1900
        %v1902 = vpop.f32.mrb[0].mxu0
        %1903 = vmatprep.mubr.bf16.mxu0 %v1778
        %1904 = vmatmul.mubr.bf16.gmra.mrb[0].mxu0 %v1746
        %v1905 = vpop.f32.mrb[0].mxu0
        %v1906 = vadd.f32 0.0, %v1905
        %v1907 = vpop.f32.mrb[0].mxu0
        %v1908 = vpop.f32.mrb[0].mxu0
        %v1909 = vadd.f32 0.0, %v1908
        %v1910 = vpop.f32.mrb[0].mxu0
        %1911 = vmatprep.mubr.bf16.mxu0 %v1779
        %1912 = vmatmul.mubr.bf16.gmra.mrb[0].mxu0 %v1747
        %v1913 = vpop.f32.mrb[0].mxu0
        %v1914 = vadd.f32 0.0, %v1913
        %v1915 = vpop.f32.mrb[0].mxu0
        %v1916 = vpop.f32.mrb[0].mxu0
        %v1917 = vadd.f32 0.0, %v1916
        %v1918 = vpop.f32.mrb[0].mxu0
        %1919 = vmatprep.mubr.bf16.mxu0 %v1780
        %1920 = vmatmul.mubr.bf16.gmra.mrb[0].mxu0 %v1748
        %v1921 = vpop.f32.mrb[0].mxu0
        %v1922 = vadd.f32 0.0, %v1921
        %v1923 = vpop.f32.mrb[0].mxu0
        %v1924 = vpop.f32.mrb[0].mxu0
        %v1925 = vadd.f32 0.0, %v1924
        %v1926 = vpop.f32.mrb[0].mxu0
        %1927 = vmatprep.mubr.bf16.mxu0 %v1781
        %1928 = vmatmul.mubr.bf16.gmra.mrb[0].mxu0 %v1749
        %v1929 = vpop.f32.mrb[0].mxu0
        %v1930 = vadd.f32 0.0, %v1929
        %v1931 = vpop.f32.mrb[0].mxu0
        %v1932 = vpop.f32.mrb[0].mxu0
        %v1933 = vadd.f32 0.0, %v1932
        %v1934 = vpop.f32.mrb[0].mxu0
        %1935 = vmatprep.mubr.bf16.mxu0 %v1782
        %1936 = vmatmul.mubr.bf16.gmra.mrb[0].mxu0 %v1750
        %v1937 = vpop.f32.mrb[0].mxu0
        %v1938 = vadd.f32 0.0, %v1937
        %v1939 = vpop.f32.mrb[0].mxu0
        %v1940 = vpop.f32.mrb[0].mxu0
        %v1941 = vadd.f32 0.0, %v1940
        %v1942 = vpop.f32.mrb[0].mxu0
        %1943 = vdwg.mxu0
        %v1944 = vsub.f32 %v286, %v1818
        %v1945 = vsub.f32 %v287, %v1821
        %v1946 = vsub.f32 %v288, %v1826
        %v1947 = vsub.f32 %v289, %v1829
        %v1948 = vsub.f32 %v290, %v1834
        %v1949 = vsub.f32 %v291, %v1837
        %v1950 = vsub.f32 %v292, %v1842
        %v1951 = vsub.f32 %v293, %v1845
        %v1952 = vsub.f32 %v294, %v1850
        %v1953 = vsub.f32 %v295, %v1853
        %v1954 = vsub.f32 %v296, %v1858
        %v1955 = vsub.f32 %v297, %v1861
        %v1956 = vsub.f32 %v298, %v1866
        %v1957 = vsub.f32 %v299, %v1869
        %v1958 = vsub.f32 %v300, %v1874
        %v1959 = vsub.f32 %v301, %v1877
        %v1960 = vsub.f32 %v302, %v1882
        %v1961 = vsub.f32 %v303, %v1885
        %v1962 = vsub.f32 %v304, %v1890
        %v1963 = vsub.f32 %v305, %v1893
        %v1964 = vsub.f32 %v306, %v1898
        %v1965 = vsub.f32 %v307, %v1901
        %v1966 = vsub.f32 %v308, %v1906
        %v1967 = vsub.f32 %v309, %v1909
        %v1968 = vsub.f32 %v310, %v1914
        %v1969 = vsub.f32 %v311, %v1917
        %v1970 = vsub.f32 %v312, %v1922
        %v1971 = vsub.f32 %v313, %v1925
        %v1972 = vsub.f32 %v314, %v1930
        %v1973 = vsub.f32 %v315, %v1933
        %v1974 = vsub.f32 %v316, %v1938
        %v1975 = vsub.f32 %v317, %v1941
        %v1976 = vpack.c.bf16 %v1945, %v1944
        %v1977 = vpack.c.bf16 %v1947, %v1946
        %v1978 = vpack.c.bf16 %v1949, %v1948
        %v1979 = vpack.c.bf16 %v1951, %v1950
        %v1980 = vpack.c.bf16 %v1953, %v1952
        %v1981 = vpack.c.bf16 %v1955, %v1954
        %v1982 = vpack.c.bf16 %v1957, %v1956
        %v1983 = vpack.c.bf16 %v1959, %v1958
        %v1984 = vpack.c.bf16 %v1961, %v1960
        %v1985 = vpack.c.bf16 %v1963, %v1962
        %v1986 = vpack.c.bf16 %v1965, %v1964
        %v1987 = vpack.c.bf16 %v1967, %v1966
        %v1988 = vpack.c.bf16 %v1969, %v1968
        %v1989 = vpack.c.bf16 %v1971, %v1970
        %v1990 = vpack.c.bf16 %v1973, %v1972
        %v1991 = vpack.c.bf16 %v1975, %v1974
        %v1992 = vld [vmem:[#allocation5] sm:$0xf]
        %v1993 = vld [vmem:[#allocation5 + $0x4] sm:$0xf]
        %v1994 = vld [vmem:[#allocation5 + $0x8] sm:$0xf]
        %v1995 = vld [vmem:[#allocation5 + $0xc] sm:$0xf]
        %v1996 = vld [vmem:[#allocation5 + $0x10] sm:$0xf]
        %v1997 = vld [vmem:[#allocation5 + $0x14] sm:$0xf]
        %v1998 = vld [vmem:[#allocation5 + $0x18] sm:$0xf]
        %v1999 = vld [vmem:[#allocation5 + $0x1c] sm:$0xf]
        %v2000 = vld [vmem:[#allocation5 + $0x20] sm:$0xf]
        %v2001 = vld [vmem:[#allocation5 + $0x24] sm:$0xf]
        %v2002 = vld [vmem:[#allocation5 + $0x28] sm:$0xf]
        %v2003 = vld [vmem:[#allocation5 + $0x2c] sm:$0xf]
        %v2004 = vld [vmem:[#allocation5 + $0x30] sm:$0xf]
        %v2005 = vld [vmem:[#allocation5 + $0x34] sm:$0xf]
        %v2006 = vld [vmem:[#allocation5 + $0x38] sm:$0xf]
        %v2007 = vld [vmem:[#allocation5 + $0x3c] sm:$0xf]
        %v2008 = vld [vmem:[%s5] sm:$0x1]
        %v2010 = vlaneseq
        %v2011 = vshrl.u32 %v2010, 7
        %v2012 = vsub.s32 0, %v2011
        %v2013 = vrot.slane %v2008, %v2012
        %v2031 = vunpack.c.l.b16 %v1992
        %v2032 = vunpack.c.l.b16 %v1993
        %v2033 = vunpack.c.l.b16 %v1994
        %v2034 = vunpack.c.l.b16 %v1995
        %v2035 = vunpack.c.l.b16 %v1996
        %v2036 = vunpack.c.l.b16 %v1997
        %v2037 = vunpack.c.l.b16 %v1998
        %v2038 = vunpack.c.l.b16 %v1999
        %v2039 = vunpack.c.l.b16 %v2000
        %v2040 = vunpack.c.l.b16 %v2001
        %v2041 = vunpack.c.l.b16 %v2002
        %v2042 = vunpack.c.l.b16 %v2003
        %v2043 = vunpack.c.l.b16 %v2004
        %v2044 = vunpack.c.l.b16 %v2005
        %v2045 = vunpack.c.l.b16 %v2006
        %v2046 = vunpack.c.l.b16 %v2007
        %v2047 = vpack.c.b16 %v2032, %v2031
        %v2048 = vpack.c.b16 %v2034, %v2033
        %v2049 = vpack.c.b16 %v2036, %v2035
        %v2050 = vpack.c.b16 %v2038, %v2037
        %v2051 = vpack.c.b16 %v2040, %v2039
        %v2052 = vpack.c.b16 %v2042, %v2041
        %v2053 = vpack.c.b16 %v2044, %v2043
        %v2054 = vpack.c.b16 %v2046, %v2045
        %2063 = vmatprep.subr.bf16.mxu0 0
        %2064 = vmatpush1.bf16.msra.mxu0 %v2047
        %2065 = vmatprep.subr.bf16.mxu0 0
        %2066 = vmatpush1.bf16.msra.mxu0 %v2048
        %2067 = vmatprep.subr.bf16.mxu0 0
        %2068 = vmatpush1.bf16.msra.mxu0 %v2049
        %2069 = vmatprep.subr.bf16.mxu0 0
        %2070 = vmatpush1.bf16.msra.mxu0 %v2050
        %2071 = vmatprep.subr.bf16.mxu0 0
        %2072 = vmatpush1.bf16.msra.mxu0 %v2051
        %2073 = vmatprep.subr.bf16.mxu0 0
        %2074 = vmatpush1.bf16.msra.mxu0 %v2052
        %2075 = vmatprep.subr.bf16.mxu0 0
        %2076 = vmatpush1.bf16.msra.mxu0 %v2053
        %2077 = vmatprep.subr.bf16.mxu0 0
        %2078 = vmatpush1.bf16.msra.mxu0 %v2054
        %2079 = vmatprep.subr.bf16.mxu0 0
        %2080 = vmatpush1.bf16.msra.mxu0 0
        %2081 = vmatprep.subr.bf16.mxu0 0
        %2082 = vmatpush1.bf16.msra.mxu0 0
        %2083 = vmatprep.subr.bf16.mxu0 0
        %2084 = vmatpush1.bf16.msra.mxu0 0
        %2085 = vmatprep.subr.bf16.mxu0 0
        %2086 = vmatpush1.bf16.msra.mxu0 0
        %2087 = vmatprep.subr.bf16.mxu0 0
        %2088 = vmatpush1.bf16.msra.mxu0 0
        %2089 = vmatprep.subr.bf16.mxu0 0
        %2090 = vmatpush1.bf16.msra.mxu0 0
        %2091 = vmatprep.subr.bf16.mxu0 0
        %2092 = vmatpush1.bf16.msra.mxu0 0
        %2093 = vmatprep.subr.bf16.mxu0 0
        %2094 = vmatpush1.bf16.msra.mxu0 0
        %2095 = vmatprep.mubr.bf16.mxu0 0
        %2096 = vmatmul.mubr.bf16.gmra.mrb[0].mxu0 %v1976
        %v2097 = vpop.f32.mrb[0].mxu0
        %v2098 = vadd.f32 %v2013, %v2097
        %v2099 = vpop.f32.mrb[0].mxu0
        %v2100 = vpop.f32.mrb[0].mxu0
        %v2101 = vadd.f32 %v2013, %v2100
        %v2102 = vpop.f32.mrb[0].mxu0
        %2103 = vmatprep.mubr.bf16.mxu0 0
        %2104 = vmatmul.mubr.bf16.gmra.mrb[0].mxu0 %v1977
        %v2105 = vpop.f32.mrb[0].mxu0
        %v2106 = vadd.f32 %v2013, %v2105
        %v2107 = vpop.f32.mrb[0].mxu0
        %v2108 = vpop.f32.mrb[0].mxu0
        %v2109 = vadd.f32 %v2013, %v2108
        %v2110 = vpop.f32.mrb[0].mxu0
        %2111 = vmatprep.mubr.bf16.mxu0 0
        %2112 = vmatmul.mubr.bf16.gmra.mrb[0].mxu0 %v1978
        %v2113 = vpop.f32.mrb[0].mxu0
        %v2114 = vadd.f32 %v2013, %v2113
        %v2115 = vpop.f32.mrb[0].mxu0
        %v2116 = vpop.f32.mrb[0].mxu0
        %v2117 = vadd.f32 %v2013, %v2116
        %v2118 = vpop.f32.mrb[0].mxu0
        %2119 = vmatprep.mubr.bf16.mxu0 0
        %2120 = vmatmul.mubr.bf16.gmra.mrb[0].mxu0 %v1979
        %v2121 = vpop.f32.mrb[0].mxu0
        %v2122 = vadd.f32 %v2013, %v2121
        %v2123 = vpop.f32.mrb[0].mxu0
        %v2124 = vpop.f32.mrb[0].mxu0
        %v2125 = vadd.f32 %v2013, %v2124
        %v2126 = vpop.f32.mrb[0].mxu0
        %2127 = vmatprep.mubr.bf16.mxu0 0
        %2128 = vmatmul.mubr.bf16.gmra.mrb[0].mxu0 %v1980
        %v2129 = vpop.f32.mrb[0].mxu0
        %v2130 = vadd.f32 %v2013, %v2129
        %v2131 = vpop.f32.mrb[0].mxu0
        %v2132 = vpop.f32.mrb[0].mxu0
        %v2133 = vadd.f32 %v2013, %v2132
        %v2134 = vpop.f32.mrb[0].mxu0
        %2135 = vmatprep.mubr.bf16.mxu0 0
        %2136 = vmatmul.mubr.bf16.gmra.mrb[0].mxu0 %v1981
        %v2137 = vpop.f32.mrb[0].mxu0
        %v2138 = vadd.f32 %v2013, %v2137
        %v2139 = vpop.f32.mrb[0].mxu0
        %v2140 = vpop.f32.mrb[0].mxu0
        %v2141 = vadd.f32 %v2013, %v2140
        %v2142 = vpop.f32.mrb[0].mxu0
        %2143 = vmatprep.mubr.bf16.mxu0 0
        %2144 = vmatmul.mubr.bf16.gmra.mrb[0].mxu0 %v1982
        %v2145 = vpop.f32.mrb[0].mxu0
        %v2146 = vadd.f32 %v2013, %v2145
        %v2147 = vpop.f32.mrb[0].mxu0
        %v2148 = vpop.f32.mrb[0].mxu0
        %v2149 = vadd.f32 %v2013, %v2148
        %v2150 = vpop.f32.mrb[0].mxu0
        %2151 = vmatprep.mubr.bf16.mxu0 0
        %2152 = vmatmul.mubr.bf16.gmra.mrb[0].mxu0 %v1983
        %v2153 = vpop.f32.mrb[0].mxu0
        %v2154 = vadd.f32 %v2013, %v2153
        %v2155 = vpop.f32.mrb[0].mxu0
        %v2156 = vpop.f32.mrb[0].mxu0
        %v2157 = vadd.f32 %v2013, %v2156
        %v2158 = vpop.f32.mrb[0].mxu0
        %2159 = vmatprep.mubr.bf16.mxu0 0
        %2160 = vmatmul.mubr.bf16.gmra.mrb[0].mxu0 %v1984
        %v2161 = vpop.f32.mrb[0].mxu0
        %v2162 = vadd.f32 %v2013, %v2161
        %v2163 = vpop.f32.mrb[0].mxu0
        %v2164 = vpop.f32.mrb[0].mxu0
        %v2165 = vadd.f32 %v2013, %v2164
        %v2166 = vpop.f32.mrb[0].mxu0
        %2167 = vmatprep.mubr.bf16.mxu0 0
        %2168 = vmatmul.mubr.bf16.gmra.mrb[0].mxu0 %v1985
        %v2169 = vpop.f32.mrb[0].mxu0
        %v2170 = vadd.f32 %v2013, %v2169
        %v2171 = vpop.f32.mrb[0].mxu0
        %v2172 = vpop.f32.mrb[0].mxu0
        %v2173 = vadd.f32 %v2013, %v2172
        %v2174 = vpop.f32.mrb[0].mxu0
        %2175 = vmatprep.mubr.bf16.mxu0 0
        %2176 = vmatmul.mubr.bf16.gmra.mrb[0].mxu0 %v1986
        %v2177 = vpop.f32.mrb[0].mxu0
        %v2178 = vadd.f32 %v2013, %v2177
        %v2179 = vpop.f32.mrb[0].mxu0
        %v2180 = vpop.f32.mrb[0].mxu0
        %v2181 = vadd.f32 %v2013, %v2180
        %v2182 = vpop.f32.mrb[0].mxu0
        %2183 = vmatprep.mubr.bf16.mxu0 0
        %2184 = vmatmul.mubr.bf16.gmra.mrb[0].mxu0 %v1987
        %v2185 = vpop.f32.mrb[0].mxu0
        %v2186 = vadd.f32 %v2013, %v2185
        %v2187 = vpop.f32.mrb[0].mxu0
        %v2188 = vpop.f32.mrb[0].mxu0
        %v2189 = vadd.f32 %v2013, %v2188
        %v2190 = vpop.f32.mrb[0].mxu0
        %2191 = vmatprep.mubr.bf16.mxu0 0
        %2192 = vmatmul.mubr.bf16.gmra.mrb[0].mxu0 %v1988
        %v2193 = vpop.f32.mrb[0].mxu0
        %v2194 = vadd.f32 %v2013, %v2193
        %v2195 = vpop.f32.mrb[0].mxu0
        %v2196 = vpop.f32.mrb[0].mxu0
        %v2197 = vadd.f32 %v2013, %v2196
        %v2198 = vpop.f32.mrb[0].mxu0
        %2199 = vmatprep.mubr.bf16.mxu0 0
        %2200 = vmatmul.mubr.bf16.gmra.mrb[0].mxu0 %v1989
        %v2201 = vpop.f32.mrb[0].mxu0
        %v2202 = vadd.f32 %v2013, %v2201
        %v2203 = vpop.f32.mrb[0].mxu0
        %v2204 = vpop.f32.mrb[0].mxu0
        %v2205 = vadd.f32 %v2013, %v2204
        %v2206 = vpop.f32.mrb[0].mxu0
        %2207 = vmatprep.mubr.bf16.mxu0 0
        %2208 = vmatmul.mubr.bf16.gmra.mrb[0].mxu0 %v1990
        %v2209 = vpop.f32.mrb[0].mxu0
        %v2210 = vadd.f32 %v2013, %v2209
        %v2211 = vpop.f32.mrb[0].mxu0
        %v2212 = vpop.f32.mrb[0].mxu0
        %v2213 = vadd.f32 %v2013, %v2212
        %v2214 = vpop.f32.mrb[0].mxu0
        %2215 = vmatprep.mubr.bf16.mxu0 0
        %2216 = vmatmul.mubr.bf16.gmra.mrb[0].mxu0 %v1991
        %v2217 = vpop.f32.mrb[0].mxu0
        %v2218 = vadd.f32 %v2013, %v2217
        %v2219 = vpop.f32.mrb[0].mxu0
        %v2220 = vpop.f32.mrb[0].mxu0
        %v2221 = vadd.f32 %v2013, %v2220
        %v2222 = vpop.f32.mrb[0].mxu0
        %2223 = vdwg.mxu0
        %v2224 = vmax.f32 %v2098, 0.0
        %v2225 = vmax.f32 %v2101, 0.0
        %v2226 = vmax.f32 %v2106, 0.0
        %v2227 = vmax.f32 %v2109, 0.0
        %v2228 = vmax.f32 %v2114, 0.0
        %v2229 = vmax.f32 %v2117, 0.0
        %v2230 = vmax.f32 %v2122, 0.0
        %v2231 = vmax.f32 %v2125, 0.0
        %v2232 = vmax.f32 %v2130, 0.0
        %v2233 = vmax.f32 %v2133, 0.0
        %v2234 = vmax.f32 %v2138, 0.0
        %v2235 = vmax.f32 %v2141, 0.0
        %v2236 = vmax.f32 %v2146, 0.0
        %v2237 = vmax.f32 %v2149, 0.0
        %v2238 = vmax.f32 %v2154, 0.0
        %v2239 = vmax.f32 %v2157, 0.0
        %v2240 = vmax.f32 %v2162, 0.0
        %v2241 = vmax.f32 %v2165, 0.0
        %v2242 = vmax.f32 %v2170, 0.0
        %v2243 = vmax.f32 %v2173, 0.0
        %v2244 = vmax.f32 %v2178, 0.0
        %v2245 = vmax.f32 %v2181, 0.0
        %v2246 = vmax.f32 %v2186, 0.0
        %v2247 = vmax.f32 %v2189, 0.0
        %v2248 = vmax.f32 %v2194, 0.0
        %v2249 = vmax.f32 %v2197, 0.0
        %v2250 = vmax.f32 %v2202, 0.0
        %v2251 = vmax.f32 %v2205, 0.0
        %v2252 = vmax.f32 %v2210, 0.0
        %v2253 = vmax.f32 %v2213, 0.0
        %v2254 = vmax.f32 %v2218, 0.0
        %v2255 = vmax.f32 %v2221, 0.0
        %v2256 = vadd.f32 %v286, %v2224
        %v2257 = vadd.f32 %v287, %v2225
        %v2258 = vadd.f32 %v288, %v2226
        %v2259 = vadd.f32 %v289, %v2227
        %v2260 = vadd.f32 %v290, %v2228
        %v2261 = vadd.f32 %v291, %v2229
        %v2262 = vadd.f32 %v292, %v2230
        %v2263 = vadd.f32 %v293, %v2231
        %v2264 = vadd.f32 %v294, %v2232
        %v2265 = vadd.f32 %v295, %v2233
        %v2266 = vadd.f32 %v296, %v2234
        %v2267 = vadd.f32 %v297, %v2235
        %v2268 = vadd.f32 %v298, %v2236
        %v2269 = vadd.f32 %v299, %v2237
        %v2270 = vadd.f32 %v300, %v2238
        %v2271 = vadd.f32 %v301, %v2239
        %v2272 = vadd.f32 %v302, %v2240
        %v2273 = vadd.f32 %v303, %v2241
        %v2274 = vadd.f32 %v304, %v2242
        %v2275 = vadd.f32 %v305, %v2243
        %v2276 = vadd.f32 %v306, %v2244
        %v2277 = vadd.f32 %v307, %v2245
        %v2278 = vadd.f32 %v308, %v2246
        %v2279 = vadd.f32 %v309, %v2247
        %v2280 = vadd.f32 %v310, %v2248
        %v2281 = vadd.f32 %v311, %v2249
        %v2282 = vadd.f32 %v312, %v2250
        %v2283 = vadd.f32 %v313, %v2251
        %v2284 = vadd.f32 %v314, %v2252
        %v2285 = vadd.f32 %v315, %v2253
        %v2286 = vadd.f32 %v316, %v2254
        %v2287 = vadd.f32 %v317, %v2255
        %2288 = vst [vmem:[%s284] sm:$0xff] %v2256
        %2289 = vst [vmem:[%s284 + $0x8] sm:$0xff] %v2257
        %2290 = vst [vmem:[%s284 + $0x10] sm:$0xff] %v2258
        %2291 = vst [vmem:[%s284 + $0x18] sm:$0xff] %v2259
        %2292 = vst [vmem:[%s284 + $0x20] sm:$0xff] %v2260
        %2293 = vst [vmem:[%s284 + $0x28] sm:$0xff] %v2261
        %2294 = vst [vmem:[%s284 + $0x30] sm:$0xff] %v2262
        %2295 = vst [vmem:[%s284 + $0x38] sm:$0xff] %v2263
        %2296 = vst [vmem:[%s284 + $0x40] sm:$0xff] %v2264
        %2297 = vst [vmem:[%s284 + $0x48] sm:$0xff] %v2265
        %2298 = vst [vmem:[%s284 + $0x50] sm:$0xff] %v2266
        %2299 = vst [vmem:[%s284 + $0x58] sm:$0xff] %v2267
        %2300 = vst [vmem:[%s284 + $0x60] sm:$0xff] %v2268
        %2301 = vst [vmem:[%s284 + $0x68] sm:$0xff] %v2269
        %2302 = vst [vmem:[%s284 + $0x70] sm:$0xff] %v2270
        %2303 = vst [vmem:[%s284 + $0x78] sm:$0xff] %v2271
        %2304 = vst [vmem:[%s284 + $0x80] sm:$0xff] %v2272
        %2305 = vst [vmem:[%s284 + $0x88] sm:$0xff] %v2273
        %2306 = vst [vmem:[%s284 + $0x90] sm:$0xff] %v2274
        %2307 = vst [vmem:[%s284 + $0x98] sm:$0xff] %v2275
        %2308 = vst [vmem:[%s284 + $0xa0] sm:$0xff] %v2276
        %2309 = vst [vmem:[%s284 + $0xa8] sm:$0xff] %v2277
        %2310 = vst [vmem:[%s284 + $0xb0] sm:$0xff] %v2278
        %2311 = vst [vmem:[%s284 + $0xb8] sm:$0xff] %v2279
        %2312 = vst [vmem:[%s284 + $0xc0] sm:$0xff] %v2280
        %2313 = vst [vmem:[%s284 + $0xc8] sm:$0xff] %v2281
        %2314 = vst [vmem:[%s284 + $0xd0] sm:$0xff] %v2282
        %2315 = vst [vmem:[%s284 + $0xd8] sm:$0xff] %v2283
        %2316 = vst [vmem:[%s284 + $0xe0] sm:$0xff] %v2284
        %2317 = vst [vmem:[%s284 + $0xe8] sm:$0xff] %v2285
        %2318 = vst [vmem:[%s284 + $0xf0] sm:$0xff] %v2286
        %2319 = vst [vmem:[%s284 + $0xf8] sm:$0xff] %v2287
        %s2320 = sand.u32 %s163, 1
        %s2321 = scalar_lea.sflag [#allocation4], %s2320
        %s2322 = sand.u32 %s163, 1
        %s2323 = smul.addr %s2322, 256
        %s2324 = scalar_lea.vmem [#allocation7], %s2323
        // Predicated region
        $region53: #{tpu_custom_call.1} parent=43 // pred_check
          %p2325 = pneg %p173
        $region54: #{tpu_custom_call.1} parent=43 // pred_check_branch
          %2327 = sbr.rel (%p2325) target = $region56
        $region55: #{tpu_custom_call.1} parent=43 // pred_region
          %s2329 = ssub.s32 4096, 4096
          %2330 = vsyncadd %s2321, %s2329
          %s2331 = smul.addr %s24, 32
          %s2332 = smul.addr %s2331, 128
          %s2333 = scalar_lea.hbm %s6, %s2332
          %s2334 = sshll.u32 %s2324, 4
          %s2335 = int_to_ptr.vmem [resolvable:$true] %s2334
          %2340 = dma.vmem_to_hbm [thread:$0]  %s2335, 4096, %s2333, %s2321, 128, 128, 8
        $region56: #{tpu_custom_call.1} parent=43 // pred_fallthru
          _
      $region44: #{tpu_custom_call.1} parent=5 // pred_fallthru
        _
      %p2341 = scmp.le.s32.totalorder 2, %s19
      // Predicated region
      $region57: #{tpu_custom_call.1} parent=5 // pred_check
        %p2342 = pneg %p2341
      $region58: #{tpu_custom_call.1} parent=5 // pred_check_branch
        %2344 = sbr.rel (%p2342) target = $region60
      $region59: #{tpu_custom_call.1} parent=5 // pred_region
        %s2345 = ssub.s32 %s19, 2
        // Predicated region
        $region61: #{tpu_custom_call.1} parent=59 // pred_check
          %p2346 = pneg %p179
        $region62: #{tpu_custom_call.1} parent=59 // pred_check_branch
          %2348 = sbr.rel (%p2346) target = $region64
        $region63: #{tpu_custom_call.1} parent=59 // pred_region
          %s2349 = sand.u32 %s164, 1
          %s2350 = scalar_lea.sflag [#allocation4], %s2349
          %s2351 = sand.u32 %s164, 1
          %s2352 = smul.addr %s2351, 256
          %s2353 = scalar_lea.vmem [#allocation7], %s2352
          %2354 = dma.done %s2350, 4096
        $region64: #{tpu_custom_call.1} parent=59 // pred_fallthru
          _
      $region60: #{tpu_custom_call.1} parent=5 // pred_fallthru
        _
    $region6: #{tpu_custom_call.1} parent=1 // loop_footer
      %s23 = sadd.s32 1, %s19
    $region7: #{tpu_custom_call.1} parent=1 // loop_footer_branch
      %18 = sbr.rel target = $region3
    $region8: #{tpu_custom_call.1} parent=1 // loop_exit
      _
    %2355 = vsyncpa [#allocation3], 1
    %s2356 = scalar_lea.sflag [#allocation3], 1
    %2357 = vsyncpa %s2356, 1
    %2358 = vsyncpa [#allocation6], 1
    %2359 = vsyncpa [#allocation4], 1
    %s2360 = scalar_lea.sflag [#allocation4], 1
    %2361 = vsyncpa %s2360, 1

</llo_original>
